<compile_context>
chip_gen: v6e
topology: v6e:2x2x1
jax: 0.10.0
libtpu: 0.0.40
codegen_flags: <defaults>
</compile_context>

<pallas_src>
import jax
import jax.numpy as jnp
from jax.experimental import pallas as pl
from jax.experimental.pallas import tpu as pltpu

BN_EPS = 1e-5
N_CAST_CHUNKS = 2  # row chunks used to overlap the inter-matmul cast with the MXU


def _round_up(v, m):
    return -(-v // m) * m


# ----------------------------------------------------------------------------
# Fused Pallas kernel
# ----------------------------------------------------------------------------
def _chunked_cast_dot(lhs_f32, rhs_bf16, n_chunks):
    """f32 LHS -> bf16 -> MXU matmul; the cast is chunked along rows so the VPU
    pack of chunk i overlaps the MXU pass of chunk i-1 (v5e/v6e MRF drain)."""
    m = lhs_f32.shape[0]
    if n_chunks <= 1 or m % n_chunks or (m // n_chunks) % 16:
        return jnp.dot(lhs_f32.astype(jnp.bfloat16), rhs_bf16,
                       preferred_element_type=jnp.float32)
    c = m // n_chunks
    parts = [
        jnp.dot(lhs_f32[i * c:(i + 1) * c].astype(jnp.bfloat16), rhs_bf16,
                preferred_element_type=jnp.float32)
        for i in range(n_chunks)
    ]
    return jnp.concatenate(parts, axis=0)


def make_gcn_kernel(conv_dims, w_offs, c4, c8):
    """conv_dims: [(cin, cout)] * 5.  w_offs: row offsets of the 7 packed weight
    segments (conv1..conv5, fc1, fc2) inside the packed bf16 weight buffer."""

    def kernel(a_ref, x_ref, p_ref, w_ref, v_ref, o_ref):
        a = a_ref[0]          # (NB, NB) bf16 normalized adjacency of this block
        h = x_ref[0]          # (NB, C0) bf16 node features of this block

        def conv(h_bf, layer):
            cin, cout = conv_dims[layer]
            w = w_ref[w_offs[layer]:w_offs[layer] + cin, 0:cout]
            # aggregate-first: the O(NB^2) term runs on min(cin, cout) channels
            # (every layer of this model expands, cin <= cout)
            agg = jnp.dot(a, h_bf, preferred_element_type=jnp.float32)
            return _chunked_cast_dot(agg, w, N_CAST_CHUNKS)

        # layers 1-3: conv -> +bias -> ReLU -> BN(scale, shift)
        for li in range(3):
            cout = conv_dims[li][1]
            y = conv(h, li)
            b = v_ref[3 * li + 0:3 * li + 1, 0:cout]
            s = v_ref[3 * li + 1:3 * li + 2, 0:cout]
            t = v_ref[3 * li + 2:3 * li + 3, 0:cout]
            h = (jnp.maximum(y + b, 0.0) * s + t).astype(jnp.bfloat16)

        # layer 4: conv (BN scale folded into W) -> +shift -> ReLU
        cout = conv_dims[3][1]
        y = conv(h, 3) + v_ref[9:10, 0:cout]
        h = jnp.maximum(y, 0.0).astype(jnp.bfloat16)

        # layer 5: conv (BN scale folded into W) -> +shift
        cout = conv_dims[4][1]
        y = conv(h, 4) + v_ref[10:11, 0:cout]
        h = y.astype(jnp.bfloat16)                                # (NB, C8)

        # head: global_add_pool -> ReLU -> fc1 -> ReLU -> dropout(id) -> fc2
        pooled = jnp.dot(p_ref[0], h, preferred_element_type=jnp.float32)
        z = jnp.maximum(pooled, 0.0)
        fw1 = w_ref[w_offs[5]:w_offs[5] + c8, 0:c4]
        z = jnp.dot(z.astype(jnp.bfloat16), fw1,
                    preferred_element_type=jnp.float32) + v_ref[11:12, 0:c4]
        z = jnp.maximum(z, 0.0)
        # fc2 padded to 128 output lanes -> single unmasked lane-dense store
        fw2 = w_ref[w_offs[6]:w_offs[6] + c4, 0:128]
        o_ref[0] = jnp.dot(z.astype(jnp.bfloat16), fw2,
                           preferred_element_type=jnp.float32) + v_ref[12:13, 0:128]

    return kernel


# ----------------------------------------------------------------------------
# Plain-JAX glue: BN folding, packed parameter buffers, adjacency, pooling
# ----------------------------------------------------------------------------
def init_params(key, num_features, hidden_dim):
    dims = [
        (num_features, hidden_dim),          # conv1
        (hidden_dim, hidden_dim * 2),        # conv2
        (hidden_dim * 2, hidden_dim * 4),    # conv3
        (hidden_dim * 4, hidden_dim * 4),    # conv4
        (hidden_dim * 4, hidden_dim * 8),    # conv5
    ]
    params = {"convs": [], "bns": []}
    for cin, cout in dims:
        key, kw, kb, kg, kbe, km, kv = jax.random.split(key, 7)
        params["convs"].append(
            dict(W=jax.random.normal(kw, (cin, cout), jnp.float32) * 0.1,
                 b=jax.random.normal(kb, (1, cout), jnp.float32) * 0.01))
        params["bns"].append(
            dict(gamma=1.0 + 0.1 * jax.random.normal(kg, (1, cout), jnp.float32),
                 beta=0.1 * jax.random.normal(kbe, (1, cout), jnp.float32),
                 mean=0.1 * jax.random.normal(km, (1, cout), jnp.float32),
                 var=jax.random.uniform(kv, (1, cout), jnp.float32, 0.5, 1.5)))
    c8, c4 = hidden_dim * 8, hidden_dim * 4
    key, k1, k2, k3, k4 = jax.random.split(key, 5)
    params["fc1_w"] = jax.random.normal(k1, (c8, c4), jnp.float32) * 0.1
    params["fc1_b"] = jax.random.normal(k2, (1, c4), jnp.float32) * 0.01
    params["fc2_w"] = jax.random.normal(k3, (c4, 1), jnp.float32) * 0.1
    params["fc2_b"] = jax.random.normal(k4, (1, 1), jnp.float32) * 0.01
    return params


def _pack_params(params):
    """Fold BN(eval), then pack all weights into one bf16 buffer and all small
    vectors into one f32 buffer (static row offsets for in-kernel slicing)."""
    convs, bns = params["convs"], params["bns"]
    conv_dims = [tuple(c["W"].shape) for c in convs]
    c8 = conv_dims[4][1]
    c4 = params["fc1_w"].shape[1]

    folded_w, vec_rows = [], []
    for i in range(5):
        c, bn = convs[i], bns[i]
        s = bn["gamma"] * jax.lax.rsqrt(bn["var"] + BN_EPS)   # (1, cout)
        t = bn["beta"] - bn["mean"] * s
        if i < 3:
            # conv -> +bias -> ReLU -> BN : bias/scale/shift kept separately
            folded_w.append(c["W"])
            vec_rows += [c["b"], s, t]                        # rows 3i..3i+2
        else:
            # conv -> BN (-> ReLU) : fold scale into W cols, bias into shift
            folded_w.append(c["W"] * s)
            vec_rows += [t + c["b"] * s]                      # rows 9, 10

    fw2_pad = jnp.zeros((c4, 128), jnp.float32).at[:, :1].set(params["fc2_w"])
    fb2_pad = jnp.zeros((1, 128), jnp.float32).at[:, :1].set(params["fc2_b"])
    vec_rows += [params["fc1_b"], fb2_pad]                    # rows 11, 12

    weights = folded_w + [params["fc1_w"], fw2_pad]
    wcol = _round_up(max(128, max(w.shape[1] for w in weights)), 128)

    w_offs, r = [], 0
    for w in weights:
        w_offs.append(r)
        r += _round_up(w.shape[0], 16)          # bf16 sublane-aligned segments
    w_rows = _round_up(r, 16)
    wbuf = jnp.zeros((w_rows, wcol), jnp.float32)
    for off, w in zip(w_offs, weights):
        wbuf = wbuf.at[off:off + w.shape[0], :w.shape[1]].set(w)
    wbuf = wbuf.astype(jnp.bfloat16)

    v_rows = _round_up(len(vec_rows), 8)
    vbuf = jnp.zeros((v_rows, wcol), jnp.float32)
    for i, v in enumerate(vec_rows):
        vbuf = vbuf.at[i:i + 1, :v.shape[1]].set(v)

    return conv_dims, w_offs, c4, c8, wbuf, vbuf


def gcn_forward(params, x, edge_index, edge_weight, batch, num_graphs,
                nodes_per_block=128):
    """GCN forward (eval semantics). Nodes must be sorted by graph id (standard
    PyG batching order) and no single graph may span a nodes_per_block boundary."""
    N, c0 = x.shape
    NB = nodes_per_block
    B = max(1, _round_up(N, NB) // NB)
    n_pad = B * NB

    # pad nodes to whole blocks (zero features, batch id -1 -> pooled nowhere)
    x_pad = jnp.zeros((n_pad, c0), jnp.float32).at[:N].set(x)
    batch_pad = jnp.full((n_pad,), -1, jnp.int32).at[:N].set(batch.astype(jnp.int32))

    # per-block dense normalized adjacency D^-1/2 (A + I) D^-1/2 (PyG GCNConv)
    src, dst = edge_index[0], edge_index[1]           # messages flow src -> dst
    blk = dst // NB
    w_e = jnp.where(src // NB == blk, edge_weight.astype(jnp.float32), 0.0)
    A = jnp.zeros((B, NB, NB), jnp.float32)
    A = A.at[blk, dst % NB, src % NB].add(w_e)
    A = A + jnp.eye(NB, dtype=jnp.float32)[None]      # self loops, weight 1
    deg = A.sum(axis=-1)
    dinv = jnp.where(deg > 0, jax.lax.rsqrt(deg), 0.0)
    A = (dinv[:, :, None] * A * dinv[:, None, :]).astype(jnp.bfloat16)

    # per-block pooling matrix over all (sublane-padded) graph rows
    gp = max(8, _round_up(num_graphs, 8))
    xb = x_pad.reshape(B, NB, c0).astype(jnp.bfloat16)
    bb = batch_pad.reshape(B, NB)
    P = (bb[:, None, :] == jnp.arange(gp, dtype=jnp.int32)[None, :, None])
    P = P.astype(jnp.bfloat16)                         # (B, gp, NB)

    conv_dims, w_offs, c4, c8, wbuf, vbuf = _pack_params(params)
    kernel = make_gcn_kernel(conv_dims, w_offs, c4, c8)
    w_rows, wcol = wbuf.shape
    v_rows = vbuf.shape[0]

    # explicit scoped-VMEM budget (double-buffered inputs + live f32 temps)
    per_step = (NB * NB + NB * c0 + gp * NB) * 2 \
        + wbuf.size * 2 + vbuf.size * 4 + gp * 128 * 4
    vmem_limit = int(min(max(2 * per_step + 8 * NB * c8 * 4, 8 << 20), 32 << 20))

    out = pl.pallas_call(
        kernel,
        out_shape=jax.ShapeDtypeStruct((B, gp, 128), jnp.float32),
        grid=(B,),
        in_specs=[
            pl.BlockSpec((1, NB, NB), lambda b: (b, 0, 0)),       # A block
            pl.BlockSpec((1, NB, c0), lambda b: (b, 0, 0)),       # X block
            pl.BlockSpec((1, gp, NB), lambda b: (b, 0, 0)),       # pool block
            pl.BlockSpec((w_rows, wcol), lambda b: (0, 0)),       # packed weights
            pl.BlockSpec((v_rows, wcol), lambda b: (0, 0)),       # packed vectors
        ],
        out_specs=pl.BlockSpec((1, gp, 128), lambda b: (b, 0, 0)),
        compiler_params=pltpu.CompilerParams(
            dimension_semantics=("parallel",),   # both TCs on v7x, no-op on v5e/v6e
            vmem_limit_bytes=vmem_limit,
        ),
    )(A, xb, P, wbuf, vbuf)

    # map each graph to the node block containing it; read lane 0 ( .view(-1) )
    g_ids = jnp.arange(num_graphs, dtype=jnp.int32)
    first_node = jnp.searchsorted(batch.astype(jnp.int32), g_ids)
    blk_of_g = (first_node // NB).astype(jnp.int32)
    return out[blk_of_g, g_ids, 0]


if __name__ == "__main__":
    NUM_FEATURES = 16
    HIDDEN_DIM = 32
    NODES_PER_GRAPH = 64
    GRAPHS = 4                     # 2 graphs per 128-node block -> grid=(2,)
    EDGES_PER_GRAPH = 128
    N_NODES = NODES_PER_GRAPH * GRAPHS

    key = jax.random.PRNGKey(0)
    keys = jax.random.split(key, 2 + GRAPHS)
    k_params, k_x = keys[0], keys[1]

    params = init_params(k_params, NUM_FEATURES, HIDDEN_DIM)
    x = jax.random.normal(k_x, (N_NODES, NUM_FEATURES), jnp.float32)

    srcs, dsts, ws = [], [], []
    for g in range(GRAPHS):
        ks, kd, kw = jax.random.split(keys[2 + g], 3)
        base = g * NODES_PER_GRAPH
        srcs.append(base + jax.random.randint(ks, (EDGES_PER_GRAPH,), 0, NODES_PER_GRAPH))
        dsts.append(base + jax.random.randint(kd, (EDGES_PER_GRAPH,), 0, NODES_PER_GRAPH))
        ws.append(jax.random.uniform(kw, (EDGES_PER_GRAPH,), jnp.float32, 0.1, 1.0))
    edge_index = jnp.stack(
        [jnp.concatenate(srcs), jnp.concatenate(dsts)], axis=0
    ).astype(jnp.int32)
    edge_weight = jnp.concatenate(ws)
    batch = jnp.repeat(jnp.arange(GRAPHS, dtype=jnp.int32), NODES_PER_GRAPH)

    out = gcn_forward(params, x, edge_index, edge_weight, batch, GRAPHS)
    jax.block_until_ready(out)
    assert out.shape == (GRAPHS,)
    print("KERNEL_OK")
</pallas_src>

<mosaic_0001>
module attributes {stable_mosaic.version = 11 : i64} {
  func.func @kernel(%arg0: i32, %arg1: memref<1x128x128xbf16, #tpu.memory_space<vmem>>, %arg2: memref<1x128x16xbf16, #tpu.memory_space<vmem>>, %arg3: memref<1x8x128xbf16, #tpu.memory_space<vmem>>, %arg4: memref<752x256xbf16, #tpu.memory_space<vmem>>, %arg5: memref<16x256xf32, #tpu.memory_space<vmem>>, %arg6: memref<1x8x128xf32, #tpu.memory_space<vmem>>) attributes {dimension_semantics = [#tpu.dimension_semantics<parallel>], iteration_bounds = array<i64: 2>, scalar_prefetch = 0 : i64, scratch_operands = 0 : i64, tpu.core_type = #tpu.core_type<tc>, window_params = [{transform_indices = @transform_0, window_bounds = array<i64: 1, 128, 128>}, {transform_indices = @transform_1, window_bounds = array<i64: 1, 128, 16>}, {transform_indices = @transform_2, window_bounds = array<i64: 1, 8, 128>}, {pipeline_mode = #tpu.pipeline_mode<synchronous>, transform_indices = @transform_3, window_bounds = array<i64: 752, 256>}, {pipeline_mode = #tpu.pipeline_mode<synchronous>, transform_indices = @transform_4, window_bounds = array<i64: 16, 256>}, {transform_indices = @transform_5, window_bounds = array<i64: 1, 8, 128>}]} {
    %c0 = arith.constant 0 : index
    %c0_0 = arith.constant 0 : index
    %c0_1 = arith.constant 0 : index
    %0 = vector.load %arg1[%c0, %c0_0, %c0_1] : memref<1x128x128xbf16, #tpu.memory_space<vmem>>, vector<1x128x128xbf16>
    %1 = vector.shape_cast %0 : vector<1x128x128xbf16> to vector<128x128xbf16>
    %c0_2 = arith.constant 0 : index
    %c0_3 = arith.constant 0 : index
    %c0_4 = arith.constant 0 : index
    %2 = vector.load %arg2[%c0_2, %c0_3, %c0_4] : memref<1x128x16xbf16, #tpu.memory_space<vmem>>, vector<1x128x16xbf16>
    %3 = vector.shape_cast %2 : vector<1x128x16xbf16> to vector<128x16xbf16>
    %c0_5 = arith.constant 0 : index
    %c0_6 = arith.constant 0 : index
    %4 = vector.load %arg4[%c0_5, %c0_6] : memref<752x256xbf16, #tpu.memory_space<vmem>>, vector<16x32xbf16>
    %cst = arith.constant dense<0.000000e+00> : vector<128x16xf32>
    %5 = tpu.matmul %1, %3, %cst {dimension_numbers = #tpu.dot_dimension_numbers<[1], [0], [0], [1], [0, 0, 1, 1], [], []>} : vector<128x128xbf16>, vector<128x16xbf16>, vector<128x16xf32> -> vector<128x16xf32>
    %6 = vector.extract_strided_slice %5 {offsets = [0, 0], sizes = [64, 16], strides = [1, 1]} : vector<128x16xf32> to vector<64x16xf32>
    %7 = arith.truncf %6 : vector<64x16xf32> to vector<64x16xbf16>
    %cst_7 = arith.constant dense<0.000000e+00> : vector<64x32xf32>
    %8 = tpu.matmul %7, %4, %cst_7 {dimension_numbers = #tpu.dot_dimension_numbers<[1], [0], [0], [1], [0, 0, 1, 1], [], []>} : vector<64x16xbf16>, vector<16x32xbf16>, vector<64x32xf32> -> vector<64x32xf32>
    %9 = vector.extract_strided_slice %5 {offsets = [64, 0], sizes = [64, 16], strides = [1, 1]} : vector<128x16xf32> to vector<64x16xf32>
    %10 = arith.truncf %9 : vector<64x16xf32> to vector<64x16xbf16>
    %cst_8 = arith.constant dense<0.000000e+00> : vector<64x32xf32>
    %11 = tpu.matmul %10, %4, %cst_8 {dimension_numbers = #tpu.dot_dimension_numbers<[1], [0], [0], [1], [0, 0, 1, 1], [], []>} : vector<64x16xbf16>, vector<16x32xbf16>, vector<64x32xf32> -> vector<64x32xf32>
    %12 = tpu.concatenate %8, %11 in 0 : vector<64x32xf32>, vector<64x32xf32> -> vector<128x32xf32>
    %c0_9 = arith.constant 0 : index
    %c0_10 = arith.constant 0 : index
    %13 = vector.load %arg5[%c0_9, %c0_10] : memref<16x256xf32, #tpu.memory_space<vmem>>, vector<1x32xf32>
    %c1 = arith.constant 1 : index
    %c0_11 = arith.constant 0 : index
    %14 = vector.load %arg5[%c1, %c0_11] : memref<16x256xf32, #tpu.memory_space<vmem>>, vector<1x32xf32>
    %c2 = arith.constant 2 : index
    %c0_12 = arith.constant 0 : index
    %15 = vector.load %arg5[%c2, %c0_12] : memref<16x256xf32, #tpu.memory_space<vmem>>, vector<1x32xf32>
    %16 = vector.broadcast %13 : vector<1x32xf32> to vector<128x32xf32>
    %17 = arith.addf %12, %16 : vector<128x32xf32>
    %cst_13 = arith.constant 0.000000e+00 : f32
    %18 = vector.broadcast %cst_13 : f32 to vector<128x32xf32>
    %19 = arith.maximumf %17, %18 : vector<128x32xf32>
    %20 = vector.broadcast %14 : vector<1x32xf32> to vector<128x32xf32>
    %21 = arith.mulf %19, %20 : vector<128x32xf32>
    %22 = vector.broadcast %15 : vector<1x32xf32> to vector<128x32xf32>
    %23 = arith.addf %21, %22 : vector<128x32xf32>
    %24 = arith.truncf %23 : vector<128x32xf32> to vector<128x32xbf16>
    %c16 = arith.constant 16 : index
    %c0_14 = arith.constant 0 : index
    %25 = vector.load %arg4[%c16, %c0_14] : memref<752x256xbf16, #tpu.memory_space<vmem>>, vector<32x64xbf16>
    %cst_15 = arith.constant dense<0.000000e+00> : vector<128x32xf32>
    %26 = tpu.matmul %1, %24, %cst_15 {dimension_numbers = #tpu.dot_dimension_numbers<[1], [0], [0], [1], [0, 0, 1, 1], [], []>} : vector<128x128xbf16>, vector<128x32xbf16>, vector<128x32xf32> -> vector<128x32xf32>
    %27 = vector.extract_strided_slice %26 {offsets = [0, 0], sizes = [64, 32], strides = [1, 1]} : vector<128x32xf32> to vector<64x32xf32>
    %28 = arith.truncf %27 : vector<64x32xf32> to vector<64x32xbf16>
    %cst_16 = arith.constant dense<0.000000e+00> : vector<64x64xf32>
    %29 = tpu.matmul %28, %25, %cst_16 {dimension_numbers = #tpu.dot_dimension_numbers<[1], [0], [0], [1], [0, 0, 1, 1], [], []>} : vector<64x32xbf16>, vector<32x64xbf16>, vector<64x64xf32> -> vector<64x64xf32>
    %30 = vector.extract_strided_slice %26 {offsets = [64, 0], sizes = [64, 32], strides = [1, 1]} : vector<128x32xf32> to vector<64x32xf32>
    %31 = arith.truncf %30 : vector<64x32xf32> to vector<64x32xbf16>
    %cst_17 = arith.constant dense<0.000000e+00> : vector<64x64xf32>
    %32 = tpu.matmul %31, %25, %cst_17 {dimension_numbers = #tpu.dot_dimension_numbers<[1], [0], [0], [1], [0, 0, 1, 1], [], []>} : vector<64x32xbf16>, vector<32x64xbf16>, vector<64x64xf32> -> vector<64x64xf32>
    %33 = tpu.concatenate %29, %32 in 0 : vector<64x64xf32>, vector<64x64xf32> -> vector<128x64xf32>
    %c3 = arith.constant 3 : index
    %c0_18 = arith.constant 0 : index
    %34 = vector.load %arg5[%c3, %c0_18] : memref<16x256xf32, #tpu.memory_space<vmem>>, vector<1x64xf32>
    %c4 = arith.constant 4 : index
    %c0_19 = arith.constant 0 : index
    %35 = vector.load %arg5[%c4, %c0_19] : memref<16x256xf32, #tpu.memory_space<vmem>>, vector<1x64xf32>
    %c5 = arith.constant 5 : index
    %c0_20 = arith.constant 0 : index
    %36 = vector.load %arg5[%c5, %c0_20] : memref<16x256xf32, #tpu.memory_space<vmem>>, vector<1x64xf32>
    %37 = vector.broadcast %34 : vector<1x64xf32> to vector<128x64xf32>
    %38 = arith.addf %33, %37 : vector<128x64xf32>
    %cst_21 = arith.constant 0.000000e+00 : f32
    %39 = vector.broadcast %cst_21 : f32 to vector<128x64xf32>
    %40 = arith.maximumf %38, %39 : vector<128x64xf32>
    %41 = vector.broadcast %35 : vector<1x64xf32> to vector<128x64xf32>
    %42 = arith.mulf %40, %41 : vector<128x64xf32>
    %43 = vector.broadcast %36 : vector<1x64xf32> to vector<128x64xf32>
    %44 = arith.addf %42, %43 : vector<128x64xf32>
    %45 = arith.truncf %44 : vector<128x64xf32> to vector<128x64xbf16>
    %c48 = arith.constant 48 : index
    %c0_22 = arith.constant 0 : index
    %46 = vector.load %arg4[%c48, %c0_22] : memref<752x256xbf16, #tpu.memory_space<vmem>>, vector<64x128xbf16>
    %cst_23 = arith.constant dense<0.000000e+00> : vector<128x64xf32>
    %47 = tpu.matmul %1, %45, %cst_23 {dimension_numbers = #tpu.dot_dimension_numbers<[1], [0], [0], [1], [0, 0, 1, 1], [], []>} : vector<128x128xbf16>, vector<128x64xbf16>, vector<128x64xf32> -> vector<128x64xf32>
    %48 = vector.extract_strided_slice %47 {offsets = [0, 0], sizes = [64, 64], strides = [1, 1]} : vector<128x64xf32> to vector<64x64xf32>
    %49 = arith.truncf %48 : vector<64x64xf32> to vector<64x64xbf16>
    %cst_24 = arith.constant dense<0.000000e+00> : vector<64x128xf32>
    %50 = tpu.matmul %49, %46, %cst_24 {dimension_numbers = #tpu.dot_dimension_numbers<[1], [0], [0], [1], [0, 0, 1, 1], [], []>} : vector<64x64xbf16>, vector<64x128xbf16>, vector<64x128xf32> -> vector<64x128xf32>
    %51 = vector.extract_strided_slice %47 {offsets = [64, 0], sizes = [64, 64], strides = [1, 1]} : vector<128x64xf32> to vector<64x64xf32>
    %52 = arith.truncf %51 : vector<64x64xf32> to vector<64x64xbf16>
    %cst_25 = arith.constant dense<0.000000e+00> : vector<64x128xf32>
    %53 = tpu.matmul %52, %46, %cst_25 {dimension_numbers = #tpu.dot_dimension_numbers<[1], [0], [0], [1], [0, 0, 1, 1], [], []>} : vector<64x64xbf16>, vector<64x128xbf16>, vector<64x128xf32> -> vector<64x128xf32>
    %54 = tpu.concatenate %50, %53 in 0 : vector<64x128xf32>, vector<64x128xf32> -> vector<128x128xf32>
    %c6 = arith.constant 6 : index
    %c0_26 = arith.constant 0 : index
    %55 = vector.load %arg5[%c6, %c0_26] : memref<16x256xf32, #tpu.memory_space<vmem>>, vector<1x128xf32>
    %c7 = arith.constant 7 : index
    %c0_27 = arith.constant 0 : index
    %56 = vector.load %arg5[%c7, %c0_27] : memref<16x256xf32, #tpu.memory_space<vmem>>, vector<1x128xf32>
    %c8 = arith.constant 8 : index
    %c0_28 = arith.constant 0 : index
    %57 = vector.load %arg5[%c8, %c0_28] : memref<16x256xf32, #tpu.memory_space<vmem>>, vector<1x128xf32>
    %58 = vector.broadcast %55 : vector<1x128xf32> to vector<128x128xf32>
    %59 = arith.addf %54, %58 : vector<128x128xf32>
    %cst_29 = arith.constant 0.000000e+00 : f32
    %60 = vector.broadcast %cst_29 : f32 to vector<128x128xf32>
    %61 = arith.maximumf %59, %60 : vector<128x128xf32>
    %62 = vector.broadcast %56 : vector<1x128xf32> to vector<128x128xf32>
    %63 = arith.mulf %61, %62 : vector<128x128xf32>
    %64 = vector.broadcast %57 : vector<1x128xf32> to vector<128x128xf32>
    %65 = arith.addf %63, %64 : vector<128x128xf32>
    %66 = arith.truncf %65 : vector<128x128xf32> to vector<128x128xbf16>
    %c112 = arith.constant 112 : index
    %c0_30 = arith.constant 0 : index
    %67 = vector.load %arg4[%c112, %c0_30] : memref<752x256xbf16, #tpu.memory_space<vmem>>, vector<128x128xbf16>
    %cst_31 = arith.constant dense<0.000000e+00> : vector<128x128xf32>
    %68 = tpu.matmul %1, %66, %cst_31 {dimension_numbers = #tpu.dot_dimension_numbers<[1], [0], [0], [1], [0, 0, 1, 1], [], []>} : vector<128x128xbf16>, vector<128x128xbf16>, vector<128x128xf32> -> vector<128x128xf32>
    %69 = vector.extract_strided_slice %68 {offsets = [0, 0], sizes = [64, 128], strides = [1, 1]} : vector<128x128xf32> to vector<64x128xf32>
    %70 = arith.truncf %69 : vector<64x128xf32> to vector<64x128xbf16>
    %cst_32 = arith.constant dense<0.000000e+00> : vector<64x128xf32>
    %71 = tpu.matmul %70, %67, %cst_32 {dimension_numbers = #tpu.dot_dimension_numbers<[1], [0], [0], [1], [0, 0, 1, 1], [], []>} : vector<64x128xbf16>, vector<128x128xbf16>, vector<64x128xf32> -> vector<64x128xf32>
    %72 = vector.extract_strided_slice %68 {offsets = [64, 0], sizes = [64, 128], strides = [1, 1]} : vector<128x128xf32> to vector<64x128xf32>
    %73 = arith.truncf %72 : vector<64x128xf32> to vector<64x128xbf16>
    %cst_33 = arith.constant dense<0.000000e+00> : vector<64x128xf32>
    %74 = tpu.matmul %73, %67, %cst_33 {dimension_numbers = #tpu.dot_dimension_numbers<[1], [0], [0], [1], [0, 0, 1, 1], [], []>} : vector<64x128xbf16>, vector<128x128xbf16>, vector<64x128xf32> -> vector<64x128xf32>
    %75 = tpu.concatenate %71, %74 in 0 : vector<64x128xf32>, vector<64x128xf32> -> vector<128x128xf32>
    %c9 = arith.constant 9 : index
    %c0_34 = arith.constant 0 : index
    %76 = vector.load %arg5[%c9, %c0_34] : memref<16x256xf32, #tpu.memory_space<vmem>>, vector<1x128xf32>
    %77 = vector.broadcast %76 : vector<1x128xf32> to vector<128x128xf32>
    %78 = arith.addf %75, %77 : vector<128x128xf32>
    %cst_35 = arith.constant 0.000000e+00 : f32
    %79 = vector.broadcast %cst_35 : f32 to vector<128x128xf32>
    %80 = arith.maximumf %78, %79 : vector<128x128xf32>
    %81 = arith.truncf %80 : vector<128x128xf32> to vector<128x128xbf16>
    %c240 = arith.constant 240 : index
    %c0_36 = arith.constant 0 : index
    %82 = vector.load %arg4[%c240, %c0_36] : memref<752x256xbf16, #tpu.memory_space<vmem>>, vector<128x256xbf16>
    %cst_37 = arith.constant dense<0.000000e+00> : vector<128x128xf32>
    %83 = tpu.matmul %1, %81, %cst_37 {dimension_numbers = #tpu.dot_dimension_numbers<[1], [0], [0], [1], [0, 0, 1, 1], [], []>} : vector<128x128xbf16>, vector<128x128xbf16>, vector<128x128xf32> -> vector<128x128xf32>
    %84 = vector.extract_strided_slice %83 {offsets = [0, 0], sizes = [64, 128], strides = [1, 1]} : vector<128x128xf32> to vector<64x128xf32>
    %85 = arith.truncf %84 : vector<64x128xf32> to vector<64x128xbf16>
    %cst_38 = arith.constant dense<0.000000e+00> : vector<64x256xf32>
    %86 = tpu.matmul %85, %82, %cst_38 {dimension_numbers = #tpu.dot_dimension_numbers<[1], [0], [0], [1], [0, 0, 1, 1], [], []>} : vector<64x128xbf16>, vector<128x256xbf16>, vector<64x256xf32> -> vector<64x256xf32>
    %87 = vector.extract_strided_slice %83 {offsets = [64, 0], sizes = [64, 128], strides = [1, 1]} : vector<128x128xf32> to vector<64x128xf32>
    %88 = arith.truncf %87 : vector<64x128xf32> to vector<64x128xbf16>
    %cst_39 = arith.constant dense<0.000000e+00> : vector<64x256xf32>
    %89 = tpu.matmul %88, %82, %cst_39 {dimension_numbers = #tpu.dot_dimension_numbers<[1], [0], [0], [1], [0, 0, 1, 1], [], []>} : vector<64x128xbf16>, vector<128x256xbf16>, vector<64x256xf32> -> vector<64x256xf32>
    %90 = tpu.concatenate %86, %89 in 0 : vector<64x256xf32>, vector<64x256xf32> -> vector<128x256xf32>
    %c10 = arith.constant 10 : index
    %c0_40 = arith.constant 0 : index
    %91 = vector.load %arg5[%c10, %c0_40] : memref<16x256xf32, #tpu.memory_space<vmem>>, vector<1x256xf32>
    %92 = vector.broadcast %91 : vector<1x256xf32> to vector<128x256xf32>
    %93 = arith.addf %90, %92 : vector<128x256xf32>
    %94 = arith.truncf %93 : vector<128x256xf32> to vector<128x256xbf16>
    %c0_41 = arith.constant 0 : index
    %c0_42 = arith.constant 0 : index
    %c0_43 = arith.constant 0 : index
    %95 = vector.load %arg3[%c0_41, %c0_42, %c0_43] : memref<1x8x128xbf16, #tpu.memory_space<vmem>>, vector<1x8x128xbf16>
    %96 = vector.shape_cast %95 : vector<1x8x128xbf16> to vector<8x128xbf16>
    %cst_44 = arith.constant dense<0.000000e+00> : vector<8x256xf32>
    %97 = tpu.matmul %96, %94, %cst_44 {dimension_numbers = #tpu.dot_dimension_numbers<[1], [0], [0], [1], [0, 0, 1, 1], [], []>} : vector<8x128xbf16>, vector<128x256xbf16>, vector<8x256xf32> -> vector<8x256xf32>
    %cst_45 = arith.constant 0.000000e+00 : f32
    %98 = vector.broadcast %cst_45 : f32 to vector<8x256xf32>
    %99 = arith.maximumf %97, %98 : vector<8x256xf32>
    %c368 = arith.constant 368 : index
    %c0_46 = arith.constant 0 : index
    %100 = vector.load %arg4[%c368, %c0_46] : memref<752x256xbf16, #tpu.memory_space<vmem>>, vector<256x128xbf16>
    %101 = arith.truncf %99 : vector<8x256xf32> to vector<8x256xbf16>
    %cst_47 = arith.constant dense<0.000000e+00> : vector<8x128xf32>
    %102 = tpu.matmul %101, %100, %cst_47 {dimension_numbers = #tpu.dot_dimension_numbers<[1], [0], [0], [1], [0, 0, 1, 1], [], []>} : vector<8x256xbf16>, vector<256x128xbf16>, vector<8x128xf32> -> vector<8x128xf32>
    %c11 = arith.constant 11 : index
    %c0_48 = arith.constant 0 : index
    %103 = vector.load %arg5[%c11, %c0_48] : memref<16x256xf32, #tpu.memory_space<vmem>>, vector<1x128xf32>
    %104 = vector.broadcast %103 : vector<1x128xf32> to vector<8x128xf32>
    %105 = arith.addf %102, %104 : vector<8x128xf32>
    %cst_49 = arith.constant 0.000000e+00 : f32
    %106 = vector.broadcast %cst_49 : f32 to vector<8x128xf32>
    %107 = arith.maximumf %105, %106 : vector<8x128xf32>
    %c624 = arith.constant 624 : index
    %c0_50 = arith.constant 0 : index
    %108 = vector.load %arg4[%c624, %c0_50] : memref<752x256xbf16, #tpu.memory_space<vmem>>, vector<128x128xbf16>
    %109 = arith.truncf %107 : vector<8x128xf32> to vector<8x128xbf16>
    %cst_51 = arith.constant dense<0.000000e+00> : vector<8x128xf32>
    %110 = tpu.matmul %109, %108, %cst_51 {dimension_numbers = #tpu.dot_dimension_numbers<[1], [0], [0], [1], [0, 0, 1, 1], [], []>} : vector<8x128xbf16>, vector<128x128xbf16>, vector<8x128xf32> -> vector<8x128xf32>
    %c12 = arith.constant 12 : index
    %c0_52 = arith.constant 0 : index
    %111 = vector.load %arg5[%c12, %c0_52] : memref<16x256xf32, #tpu.memory_space<vmem>>, vector<1x128xf32>
    %112 = vector.broadcast %111 : vector<1x128xf32> to vector<8x128xf32>
    %113 = arith.addf %110, %112 : vector<8x128xf32>
    %c0_53 = arith.constant 0 : index
    %c0_54 = arith.constant 0 : index
    %c0_55 = arith.constant 0 : index
    %114 = vector.load %arg6[%c0_53, %c0_54, %c0_55] : memref<1x8x128xf32, #tpu.memory_space<vmem>>, vector<1x8x128xf32>
    %115 = vector.shape_cast %114 : vector<1x8x128xf32> to vector<8x128xf32>
    %116 = vector.shape_cast %113 : vector<8x128xf32> to vector<1x8x128xf32>
    tpu.vector_store %arg6[%c0_53, %c0_54, %c0_55], %116 {strides = array<i32>} : memref<1x8x128xf32, #tpu.memory_space<vmem>>, vector<1x8x128xf32>,
    return
  }
  func.func @transform_0(%arg0: i32) -> (i32, i32, i32) {
    %c0_i32 = arith.constant 0 : i32
    %c0_i32_0 = arith.constant 0 : i32
    %c0_i32_1 = arith.constant 0 : i32
    return %arg0, %c0_i32, %c0_i32_0 : i32, i32, i32
  }
  func.func @transform_1(%arg0: i32) -> (i32, i32, i32) {
    %c0_i32 = arith.constant 0 : i32
    %c0_i32_0 = arith.constant 0 : i32
    %c0_i32_1 = arith.constant 0 : i32
    return %arg0, %c0_i32, %c0_i32_0 : i32, i32, i32
  }
  func.func @transform_2(%arg0: i32) -> (i32, i32, i32) {
    %c0_i32 = arith.constant 0 : i32
    %c0_i32_0 = arith.constant 0 : i32
    %c0_i32_1 = arith.constant 0 : i32
    return %arg0, %c0_i32, %c0_i32_0 : i32, i32, i32
  }
  func.func @transform_3(%arg0: i32) -> (i32, i32) {
    %c0_i32 = arith.constant 0 : i32
    %c0_i32_0 = arith.constant 0 : i32
    %c0_i32_1 = arith.constant 0 : i32
    return %c0_i32, %c0_i32_0 : i32, i32
  }
  func.func @transform_4(%arg0: i32) -> (i32, i32) {
    %c0_i32 = arith.constant 0 : i32
    %c0_i32_0 = arith.constant 0 : i32
    %c0_i32_1 = arith.constant 0 : i32
    return %c0_i32, %c0_i32_0 : i32, i32
  }
  func.func @transform_5(%arg0: i32) -> (i32, i32, i32) {
    %c0_i32 = arith.constant 0 : i32
    %c0_i32_0 = arith.constant 0 : i32
    %c0_i32_1 = arith.constant 0 : i32
    return %arg0, %c0_i32, %c0_i32_0 : i32, i32, i32
  }
}

</mosaic_0001>

<llo_original>
// kernel: tpu_custom_call.1
$region0: #{tpu_custom_call.1}
  #allocation0 [shape = 'u32[]', space=smem, size = 0x4, offset = 0x4, fixed_abs, tag = 'smem constant byte address 0x4 - core index']
  #allocation1 [shape = 'u32[144,128]{1,0:T(1,128)}', space=vmem, size = 0x12000, scoped, tag = 'internal scratch']
  %s0 = inlined_call_operand.vmem [shape: bf16[2,128,128], index: 0, kind: input, shape index: {}]
  %s1 = inlined_call_operand.vmem [shape: bf16[2,128,16], index: 1, kind: input, shape index: {}]
  %s2 = inlined_call_operand.vmem [shape: bf16[2,8,128], index: 2, kind: input, shape index: {}]
  %s3 = inlined_call_operand.hbm [shape: bf16[752,256], index: 3, kind: input, shape index: {}]
  %s4 = inlined_call_operand.hbm [shape: f32[16,256], index: 4, kind: input, shape index: {}]
  %s5 = inlined_call_operand.hbm [shape: f32[2,8,128], index: 5, kind: output, shape index: {}]
  %s6 = sld [smem:[#allocation0]]
  $region61: #{tpu_custom_call.1} parent=0
    _
  %s8 = ssub.s32 1, %s6
  %s9 = scalar_select 0, %s8, %s6
  $region1: #{tpu_custom_call.1} parent=0
    #allocation2 [shape = 'u8[385024]{0}', space=vmem, size = 0x5e000, scoped, tag = 'input window, operand 3, single buffered']
    #allocation3 [shape = 's32[2]{0}', space=sflag, size = 0x8, scoped, tag = 'scoped memory for tpu_custom_call.1']
    #allocation4 [shape = 's32[2]{0}', space=sflag, size = 0x8, scoped, tag = 'scoped memory for tpu_custom_call.1']
    #allocation5 [shape = 'u8[16384]{0}', space=vmem, size = 0x4000, scoped, tag = 'input window, operand 4, single buffered']
    #allocation6 [shape = 's32[1]{0}', space=sflag, size = 0x4, scoped, tag = 'scoped memory for tpu_custom_call.1']
    #allocation7 [shape = 'u8[8192]{0}', space=vmem, size = 0x2000, scoped, tag = 'output window, operand 0']
    %10 = vsyncpa [#allocation3], 0
    %11 = vsyncpa [#allocation6], 0
    %12 = vsyncpa [#allocation4], 0
    %s13 = scalar_lea.sflag [#allocation4], 1
    %14 = vsyncpa %s13, 0
    loop: start=0, step=1, limit=4
    $region2: #{tpu_custom_call.1} parent=1 // loop_pre_header
      _
    $region3: #{tpu_custom_call.1} parent=1 // loop_header
      %s16 = sphi 0, %s20
      %p17 = scmp.ge.s32.totalorder %s16, 4
      %s26 = sphi 0, %s28
      %s29 = sphi 0, %s26
      %s30 = sphi 0, %s29
      %s46 = sphi 0, %s30
      %s52 = sphi 0, %s54
      %s55 = sphi 0, %s52
      %s56 = sphi 0, %s55
      %s72 = sphi 0, %s56
      %s78 = sphi 0, %s80
      %s81 = sphi 0, %s78
      %s82 = sphi 0, %s81
      %s98 = sphi 0, %s82
      %s102 = sphi 0, %s102
      %s104 = sphi 0, %s102
      %s105 = sphi 0, %s104
      %s119 = sphi 0, %s105
      %s123 = sphi 0, %s123
      %s125 = sphi 0, %s123
      %s126 = sphi 0, %s125
      %s140 = sphi 0, %s126
      %s146 = sphi 0, %s148
      %s149 = sphi 0, %s146
      %s150 = sphi 0, %s149
      %s166 = sphi 0, %s150
    $region4: #{tpu_custom_call.1} parent=1 // loop_header_branch
      %19 = sbr.rel (%p17) target = $region8
    $region5: #{tpu_custom_call.1} parent=1 // loop_body
      %s21 = ssub.s32 %s16, 1
      %s22 = ssub.s32 %s16, 2
      %s23 = sadd.s32 %s16, 1
      %s24 = ssub.s32 %s16, %s23
      %p25 = scmp.eq.s32.totalorder %s24, 0
      %s27 = sadd.s32 %s26, 1
      %s28 = scalar_select %p25, %s26, %s27
      %p31 = pneg %p25
      %p32 = scmp.eq.s32.totalorder %s16, 1
      %p33 = por %p31, %p32
      %p34 = scmp.ne.s32.totalorder %s26, %s29
      %p35 = scmp.eq.s32.totalorder %s16, 0
      %p36 = por %p34, %p35
      %p37 = scmp.ne.s32.totalorder %s26, %s29
      %p38 = scmp.eq.s32.totalorder %s21, 1
      %p39 = por %p37, %p38
      %p40 = scmp.ne.s32.totalorder %s29, %s30
      %p41 = scmp.eq.s32.totalorder %s21, 0
      %p42 = por %p40, %p41
      %p43 = scmp.ne.s32.totalorder %s29, %s30
      %p44 = scmp.eq.s32.totalorder %s22, 1
      %p45 = por %p43, %p44
      %p47 = scmp.ne.s32.totalorder %s30, %s46
      %p48 = scmp.eq.s32.totalorder %s22, 0
      %p49 = por %p47, %p48
      %s50 = ssub.s32 %s16, %s23
      %p51 = scmp.eq.s32.totalorder %s50, 0
      %s53 = sadd.s32 %s52, 1
      %s54 = scalar_select %p51, %s52, %s53
      %p57 = pneg %p51
      %p58 = scmp.eq.s32.totalorder %s16, 1
      %p59 = por %p57, %p58
      %p60 = scmp.ne.s32.totalorder %s52, %s55
      %p61 = scmp.eq.s32.totalorder %s16, 0
      %p62 = por %p60, %p61
      %p63 = scmp.ne.s32.totalorder %s52, %s55
      %p64 = scmp.eq.s32.totalorder %s21, 1
      %p65 = por %p63, %p64
      %p66 = scmp.ne.s32.totalorder %s55, %s56
      %p67 = scmp.eq.s32.totalorder %s21, 0
      %p68 = por %p66, %p67
      %p69 = scmp.ne.s32.totalorder %s55, %s56
      %p70 = scmp.eq.s32.totalorder %s22, 1
      %p71 = por %p69, %p70
      %p73 = scmp.ne.s32.totalorder %s56, %s72
      %p74 = scmp.eq.s32.totalorder %s22, 0
      %p75 = por %p73, %p74
      %s76 = ssub.s32 %s16, %s23
      %p77 = scmp.eq.s32.totalorder %s76, 0
      %s79 = sadd.s32 %s78, 1
      %s80 = scalar_select %p77, %s78, %s79
      %p83 = pneg %p77
      %p84 = scmp.eq.s32.totalorder %s16, 1
      %p85 = por %p83, %p84
      %p86 = scmp.ne.s32.totalorder %s78, %s81
      %p87 = scmp.eq.s32.totalorder %s16, 0
      %p88 = por %p86, %p87
      %p89 = scmp.ne.s32.totalorder %s78, %s81
      %p90 = scmp.eq.s32.totalorder %s21, 1
      %p91 = por %p89, %p90
      %p92 = scmp.ne.s32.totalorder %s81, %s82
      %p93 = scmp.eq.s32.totalorder %s21, 0
      %p94 = por %p92, %p93
      %p95 = scmp.ne.s32.totalorder %s81, %s82
      %p96 = scmp.eq.s32.totalorder %s22, 1
      %p97 = por %p95, %p96
      %p99 = scmp.ne.s32.totalorder %s82, %s98
      %p100 = scmp.eq.s32.totalorder %s22, 0
      %p101 = por %p99, %p100
      %s103 = sadd.s32 %s102, 1
      %p106 = scmp.eq.s32.totalorder %s16, 1
      %p107 = scmp.ne.s32.totalorder %s102, %s104
      %p108 = scmp.eq.s32.totalorder %s16, 0
      %p109 = por %p107, %p108
      %p110 = scmp.ne.s32.totalorder %s102, %s104
      %p111 = scmp.eq.s32.totalorder %s21, 1
      %p112 = por %p110, %p111
      %p113 = scmp.ne.s32.totalorder %s104, %s105
      %p114 = scmp.eq.s32.totalorder %s21, 0
      %p115 = por %p113, %p114
      %p116 = scmp.ne.s32.totalorder %s104, %s105
      %p117 = scmp.eq.s32.totalorder %s22, 1
      %p118 = por %p116, %p117
      %p120 = scmp.ne.s32.totalorder %s105, %s119
      %p121 = scmp.eq.s32.totalorder %s22, 0
      %p122 = por %p120, %p121
      %s124 = sadd.s32 %s123, 1
      %p127 = scmp.eq.s32.totalorder %s16, 1
      %p128 = scmp.ne.s32.totalorder %s123, %s125
      %p129 = scmp.eq.s32.totalorder %s16, 0
      %p130 = por %p128, %p129
      %p131 = scmp.ne.s32.totalorder %s123, %s125
      %p132 = scmp.eq.s32.totalorder %s21, 1
      %p133 = por %p131, %p132
      %p134 = scmp.ne.s32.totalorder %s125, %s126
      %p135 = scmp.eq.s32.totalorder %s21, 0
      %p136 = por %p134, %p135
      %p137 = scmp.ne.s32.totalorder %s125, %s126
      %p138 = scmp.eq.s32.totalorder %s22, 1
      %p139 = por %p137, %p138
      %p141 = scmp.ne.s32.totalorder %s126, %s140
      %p142 = scmp.eq.s32.totalorder %s22, 0
      %p143 = por %p141, %p142
      %s144 = ssub.s32 %s16, %s23
      %p145 = scmp.eq.s32.totalorder %s144, 0
      %s147 = sadd.s32 %s146, 1
      %s148 = scalar_select %p145, %s146, %s147
      %p151 = pneg %p145
      %p152 = scmp.eq.s32.totalorder %s16, 1
      %p153 = por %p151, %p152
      %p154 = scmp.ne.s32.totalorder %s146, %s149
      %p155 = scmp.eq.s32.totalorder %s16, 0
      %p156 = por %p154, %p155
      %p157 = scmp.ne.s32.totalorder %s146, %s149
      %p158 = scmp.eq.s32.totalorder %s21, 1
      %p159 = por %p157, %p158
      %p160 = scmp.ne.s32.totalorder %s149, %s150
      %p161 = scmp.eq.s32.totalorder %s21, 0
      %p162 = por %p160, %p161
      %p163 = scmp.ne.s32.totalorder %s149, %s150
      %p164 = scmp.eq.s32.totalorder %s22, 1
      %p165 = por %p163, %p164
      %p167 = scmp.ne.s32.totalorder %s150, %s166
      %p168 = scmp.eq.s32.totalorder %s22, 0
      %p169 = por %p167, %p168
      %p170 = scmp.le.s32.totalorder 1, %s16
      %p171 = scmp.lt.s32.totalorder %s16, 3
      %p172 = pnand %p170, %p171
      %p173 = pneg %p172
      // Predicated region
      $region9: #{tpu_custom_call.1} parent=5 // pred_check
        _
      $region10: #{tpu_custom_call.1} parent=5 // pred_check_branch
        %175 = sbr.rel (%p172) target = $region12
      $region11: #{tpu_custom_call.1} parent=5 // pred_region
        %s176 = ssub.s32 %s16, 1
        // Predicated region
        $region13: #{tpu_custom_call.1} parent=11 // pred_check
          %p177 = pneg %p115
        $region14: #{tpu_custom_call.1} parent=11 // pred_check_branch
          %179 = sbr.rel (%p177) target = $region16
        $region15: #{tpu_custom_call.1} parent=11 // pred_region
          %s181 = ssub.s32 12032, 12032
          %182 = vsyncadd [#allocation3], %s181
          %s183 = sshll.u32 [#allocation2], 4
          %s184 = int_to_ptr.vmem [resolvable:$true] %s183
          %189 = dma.hbm_to_vmem [thread:$0]  %s3, 12032, %s184, [#allocation3], 128, 128, 8
        $region16: #{tpu_custom_call.1} parent=11 // pred_fallthru
          _
        // Predicated region
        $region17: #{tpu_custom_call.1} parent=11 // pred_check
          %p190 = pneg %p136
        $region18: #{tpu_custom_call.1} parent=11 // pred_check_branch
          %192 = sbr.rel (%p190) target = $region20
        $region19: #{tpu_custom_call.1} parent=11 // pred_region
          %s194 = ssub.s32 512, 512
          %195 = vsyncadd [#allocation6], %s194
          %s196 = sshll.u32 [#allocation5], 4
          %s197 = int_to_ptr.vmem [resolvable:$true] %s196
          %202 = dma.hbm_to_vmem [thread:$0]  %s4, 512, %s197, [#allocation6], 256, 256, 16
        $region20: #{tpu_custom_call.1} parent=11 // pred_fallthru
          _
      $region12: #{tpu_custom_call.1} parent=5 // pred_fallthru
        _
      %p203 = scmp.lt.s32.totalorder %s16, 2
      // Predicated region
      $region21: #{tpu_custom_call.1} parent=5 // pred_check
        %p204 = pneg %p203
      $region22: #{tpu_custom_call.1} parent=5 // pred_check_branch
        %206 = sbr.rel (%p204) target = $region24
      $region23: #{tpu_custom_call.1} parent=5 // pred_region
        // Predicated region
        $region25: #{tpu_custom_call.1} parent=23 // pred_check
          %p207 = pneg %p36
        $region26: #{tpu_custom_call.1} parent=23 // pred_check_branch
          %209 = sbr.rel (%p207) target = $region28
        $region27: #{tpu_custom_call.1} parent=23 // pred_region
          %p210 = scmp.lt.s32.totalorder %s16, 1
          %s211 = scalar_select %p210, %s16, 1
          %s212 = smul.addr %s211, 16
          %s213 = smul.addr %s212, 4
          %s214 = scalar_lea.vmem %s0, %s213
        $region28: #{tpu_custom_call.1} parent=23 // pred_fallthru
          _
        // Predicated region
        $region29: #{tpu_custom_call.1} parent=23 // pred_check
          %p215 = pneg %p62
        $region30: #{tpu_custom_call.1} parent=23 // pred_check_branch
          %217 = sbr.rel (%p215) target = $region32
        $region31: #{tpu_custom_call.1} parent=23 // pred_region
          %p218 = scmp.lt.s32.totalorder %s16, 1
          %s219 = scalar_select %p218, %s16, 1
          %s220 = smul.addr %s219, 16
          %s221 = smul.addr %s220, 4
          %s222 = scalar_lea.vmem %s1, %s221
        $region32: #{tpu_custom_call.1} parent=23 // pred_fallthru
          _
        // Predicated region
        $region33: #{tpu_custom_call.1} parent=23 // pred_check
          %p223 = pneg %p88
        $region34: #{tpu_custom_call.1} parent=23 // pred_check_branch
          %225 = sbr.rel (%p223) target = $region36
        $region35: #{tpu_custom_call.1} parent=23 // pred_region
          %p226 = scmp.lt.s32.totalorder %s16, 1
          %s227 = scalar_select %p226, %s16, 1
          %s228 = smul.addr %s227, 4
          %s229 = scalar_lea.vmem %s2, %s228
        $region36: #{tpu_custom_call.1} parent=23 // pred_fallthru
          _
      $region24: #{tpu_custom_call.1} parent=5 // pred_fallthru
        _
      %p230 = scmp.le.s32.totalorder 1, %s16
      %p231 = scmp.lt.s32.totalorder %s16, 3
      %p232 = pnand %p230, %p231
      %p233 = pneg %p232
      // Predicated region
      $region37: #{tpu_custom_call.1} parent=5 // pred_check
        _
      $region38: #{tpu_custom_call.1} parent=5 // pred_check_branch
        %235 = sbr.rel (%p232) target = $region40
      $region39: #{tpu_custom_call.1} parent=5 // pred_region
        %s236 = ssub.s32 %s16, 1
        // Predicated region
        $region41: #{tpu_custom_call.1} parent=39 // pred_check
          %p237 = pneg %p115
        $region42: #{tpu_custom_call.1} parent=39 // pred_check_branch
          %239 = sbr.rel (%p237) target = $region44
        $region43: #{tpu_custom_call.1} parent=39 // pred_region
          %240 = dma.done [#allocation3], 12032
        $region44: #{tpu_custom_call.1} parent=39 // pred_fallthru
          _
        // Predicated region
        $region45: #{tpu_custom_call.1} parent=39 // pred_check
          %p241 = pneg %p136
        $region46: #{tpu_custom_call.1} parent=39 // pred_check_branch
          %243 = sbr.rel (%p241) target = $region48
        $region47: #{tpu_custom_call.1} parent=39 // pred_region
          %244 = dma.done [#allocation6], 512
        $region48: #{tpu_custom_call.1} parent=39 // pred_fallthru
          _
        %p245 = scmp.lt.s32.totalorder %s21, 1
        %s246 = scalar_select %p245, %s21, 1
        %s247 = smul.addr %s246, 16
        %s248 = smul.addr %s247, 4
        %s249 = scalar_lea.vmem %s0, %s248
        %p250 = pneg %p42
        %p251 = pneg %p39
        %p252 = scmp.lt.s32.totalorder %s21, 1
        %s253 = scalar_select %p252, %s21, 1
        %s254 = smul.addr %s253, 16
        %s255 = smul.addr %s254, 4
        %s256 = scalar_lea.vmem %s1, %s255
        %p257 = pneg %p68
        %p258 = pneg %p65
        %p259 = scmp.lt.s32.totalorder %s21, 1
        %s260 = scalar_select %p259, %s21, 1
        %s261 = smul.addr %s260, 4
        %s262 = scalar_lea.vmem %s2, %s261
        %p263 = pneg %p94
        %p264 = pneg %p91
        %p265 = pneg %p115
        %p266 = pneg %p112
        %p267 = pneg %p136
        %p268 = pneg %p133
        %p269 = pneg %p162
        %p270 = pneg %p159
        %s271 = sand.u32 %s149, 1
        %s272 = scalar_lea.sflag [#allocation4], %s271
        %s273 = sand.u32 %s149, 1
        %s274 = smul.addr %s273, 8
        %s275 = scalar_lea.vmem [#allocation7], %s274
        %p276 = scmp.lt.s32.totalorder %s21, 1
        %s277 = scalar_select %p276, %s21, 1
        %s278 = smul.addr %s277, 16
        %s279 = smul.addr %s278, 4
        %s280 = scalar_lea.vmem %s0, %s279
        %p281 = scmp.lt.s32.totalorder %s21, 1
        %s282 = scalar_select %p281, %s21, 1
        %s283 = smul.addr %s282, 16
        %s284 = smul.addr %s283, 4
        %s285 = scalar_lea.vmem %s1, %s284
        %p286 = scmp.lt.s32.totalorder %s21, 1
        %s287 = scalar_select %p286, %s21, 1
        %s288 = smul.addr %s287, 4
        %s289 = scalar_lea.vmem %s2, %s288
        %v291 = vld [vmem:[%s280] sm:$0xf]
        %v292 = vld [vmem:[%s280 + $0x4] sm:$0xf]
        %v293 = vld [vmem:[%s280 + $0x8] sm:$0xf]
        %v294 = vld [vmem:[%s280 + $0xc] sm:$0xf]
        %v295 = vld [vmem:[%s280 + $0x10] sm:$0xf]
        %v296 = vld [vmem:[%s280 + $0x14] sm:$0xf]
        %v297 = vld [vmem:[%s280 + $0x18] sm:$0xf]
        %v298 = vld [vmem:[%s280 + $0x1c] sm:$0xf]
        %v299 = vld [vmem:[%s280 + $0x20] sm:$0xf]
        %v300 = vld [vmem:[%s280 + $0x24] sm:$0xf]
        %v301 = vld [vmem:[%s280 + $0x28] sm:$0xf]
        %v302 = vld [vmem:[%s280 + $0x2c] sm:$0xf]
        %v303 = vld [vmem:[%s280 + $0x30] sm:$0xf]
        %v304 = vld [vmem:[%s280 + $0x34] sm:$0xf]
        %v305 = vld [vmem:[%s280 + $0x38] sm:$0xf]
        %v306 = vld [vmem:[%s280 + $0x3c] sm:$0xf]
        %v307 = vld [vmem:[%s285] sm:$0xf]
        %v308 = vld [vmem:[%s285 + $0x4] sm:$0xf]
        %v309 = vld [vmem:[%s285 + $0x8] sm:$0xf]
        %v310 = vld [vmem:[%s285 + $0xc] sm:$0xf]
        %v311 = vld [vmem:[%s285 + $0x10] sm:$0xf]
        %v312 = vld [vmem:[%s285 + $0x14] sm:$0xf]
        %v313 = vld [vmem:[%s285 + $0x18] sm:$0xf]
        %v314 = vld [vmem:[%s285 + $0x1c] sm:$0xf]
        %v315 = vld [vmem:[%s285 + $0x20] sm:$0xf]
        %v316 = vld [vmem:[%s285 + $0x24] sm:$0xf]
        %v317 = vld [vmem:[%s285 + $0x28] sm:$0xf]
        %v318 = vld [vmem:[%s285 + $0x2c] sm:$0xf]
        %v319 = vld [vmem:[%s285 + $0x30] sm:$0xf]
        %v320 = vld [vmem:[%s285 + $0x34] sm:$0xf]
        %v321 = vld [vmem:[%s285 + $0x38] sm:$0xf]
        %v322 = vld [vmem:[%s285 + $0x3c] sm:$0xf]
        %v323 = vld [vmem:[#allocation2] sm:$0xf]
        %v324 = vld [vmem:[#allocation2 + $0x8] sm:$0xf]
        %v341 = vunpack.c.l.b16 %v291
        %v342 = vunpack.c.l.b16 %v292
        %v343 = vunpack.c.l.b16 %v293
        %v344 = vunpack.c.l.b16 %v294
        %v345 = vunpack.c.l.b16 %v295
        %v346 = vunpack.c.l.b16 %v296
        %v347 = vunpack.c.l.b16 %v297
        %v348 = vunpack.c.l.b16 %v298
        %v349 = vunpack.c.l.b16 %v299
        %v350 = vunpack.c.l.b16 %v300
        %v351 = vunpack.c.l.b16 %v301
        %v352 = vunpack.c.l.b16 %v302
        %v353 = vunpack.c.l.b16 %v303
        %v354 = vunpack.c.l.b16 %v304
        %v355 = vunpack.c.l.b16 %v305
        %v356 = vunpack.c.l.b16 %v306
        %v357 = vpack.c.b16 %v342, %v341
        %v358 = vpack.c.b16 %v344, %v343
        %v359 = vpack.c.b16 %v346, %v345
        %v360 = vpack.c.b16 %v348, %v347
        %v361 = vpack.c.b16 %v350, %v349
        %v362 = vpack.c.b16 %v352, %v351
        %v363 = vpack.c.b16 %v354, %v353
        %v364 = vpack.c.b16 %v356, %v355
        %v389 = vunpack.c.l.b16 %v307
        %v390 = vunpack.c.l.b16 %v308
        %v391 = vunpack.c.l.b16 %v309
        %v392 = vunpack.c.l.b16 %v310
        %v393 = vunpack.c.l.b16 %v311
        %v394 = vunpack.c.l.b16 %v312
        %v395 = vunpack.c.l.b16 %v313
        %v396 = vunpack.c.l.b16 %v314
        %v397 = vunpack.c.l.b16 %v315
        %v398 = vunpack.c.l.b16 %v316
        %v399 = vunpack.c.l.b16 %v317
        %v400 = vunpack.c.l.b16 %v318
        %v401 = vunpack.c.l.b16 %v319
        %v402 = vunpack.c.l.b16 %v320
        %v403 = vunpack.c.l.b16 %v321
        %v404 = vunpack.c.l.b16 %v322
        %v405 = vpack.c.b16 %v390, %v389
        %v406 = vpack.c.b16 %v392, %v391
        %v407 = vpack.c.b16 %v394, %v393
        %v408 = vpack.c.b16 %v396, %v395
        %v409 = vpack.c.b16 %v398, %v397
        %v410 = vpack.c.b16 %v400, %v399
        %v411 = vpack.c.b16 %v402, %v401
        %v412 = vpack.c.b16 %v404, %v403
        %421 = vmatprep.subr.bf16.mxu0 0
        %422 = vmatpush1.bf16.msra.mxu0 %v412
        %423 = vmatprep.subr.bf16.mxu0 0
        %424 = vmatpush1.bf16.msra.mxu0 %v411
        %425 = vmatprep.subr.bf16.mxu0 0
        %426 = vmatpush1.bf16.msra.mxu0 %v410
        %427 = vmatprep.subr.bf16.mxu0 0
        %428 = vmatpush1.bf16.msra.mxu0 %v409
        %429 = vmatprep.subr.bf16.mxu0 0
        %430 = vmatpush1.bf16.msra.mxu0 %v408
        %431 = vmatprep.subr.bf16.mxu0 0
        %432 = vmatpush1.bf16.msra.mxu0 %v407
        %433 = vmatprep.subr.bf16.mxu0 0
        %434 = vmatpush1.bf16.msra.mxu0 %v406
        %435 = vmatprep.subr.bf16.mxu0 0
        %436 = vmatpush1.bf16.msra.mxu0 %v405
        %437 = vmatprep.subr.bf16.mxu0 0
        %438 = vmatpush2.bf16.msra.mxu0 0
        %439 = vmatprep.subr.bf16.mxu0 0
        %440 = vmatpush2.bf16.msra.mxu0 0
        %441 = vmatprep.subr.bf16.mxu0 0
        %442 = vmatpush2.bf16.msra.mxu0 0
        %443 = vmatprep.subr.bf16.mxu0 0
        %444 = vmatpush2.bf16.msra.mxu0 0
        %445 = vmatprep.subr.bf16.mxu0 0
        %446 = vmatpush2.bf16.msra.mxu0 0
        %447 = vmatprep.subr.bf16.mxu0 0
        %448 = vmatpush2.bf16.msra.mxu0 0
        %449 = vmatprep.subr.bf16.mxu0 0
        %450 = vmatpush2.bf16.msra.mxu0 0
        %451 = vmatprep.subr.bf16.mxu0 0
        %452 = vmatpush2.bf16.msra.mxu0 0
        %453 = vmatprep.mubr.bf16.mxu0 0
        %454 = vmatmul.mubr.bf16.gmra.mxu0 %v357
        %v455 = vpop.f32.mrf.mxu0
        %v456 = vadd.f32 0.0, %v455
        %v457 = vpop.f32.mrf.mxu0
        %v458 = vpop.f32.mrf.mxu0
        %v459 = vadd.f32 0.0, %v458
        %v460 = vpop.f32.mrf.mxu0
        %461 = vmatprep.mubr.bf16.mxu0 0
        %462 = vmatmul.mubr.bf16.gmra.mxu0 %v358
        %v463 = vpop.f32.mrf.mxu0
        %v464 = vadd.f32 0.0, %v463
        %v465 = vpop.f32.mrf.mxu0
        %v466 = vpop.f32.mrf.mxu0
        %v467 = vadd.f32 0.0, %v466
        %v468 = vpop.f32.mrf.mxu0
        %469 = vmatprep.mubr.bf16.mxu0 0
        %470 = vmatmul.mubr.bf16.gmra.mxu0 %v359
        %v471 = vpop.f32.mrf.mxu0
        %v472 = vadd.f32 0.0, %v471
        %v473 = vpop.f32.mrf.mxu0
        %v474 = vpop.f32.mrf.mxu0
        %v475 = vadd.f32 0.0, %v474
        %v476 = vpop.f32.mrf.mxu0
        %477 = vmatprep.mubr.bf16.mxu0 0
        %478 = vmatmul.mubr.bf16.gmra.mxu0 %v360
        %v479 = vpop.f32.mrf.mxu0
        %v480 = vadd.f32 0.0, %v479
        %v481 = vpop.f32.mrf.mxu0
        %v482 = vpop.f32.mrf.mxu0
        %v483 = vadd.f32 0.0, %v482
        %v484 = vpop.f32.mrf.mxu0
        %485 = vmatprep.mubr.bf16.mxu0 0
        %486 = vmatmul.mubr.bf16.gmra.mxu0 %v361
        %v487 = vpop.f32.mrf.mxu0
        %v488 = vadd.f32 0.0, %v487
        %v489 = vpop.f32.mrf.mxu0
        %v490 = vpop.f32.mrf.mxu0
        %v491 = vadd.f32 0.0, %v490
        %v492 = vpop.f32.mrf.mxu0
        %493 = vmatprep.mubr.bf16.mxu0 0
        %494 = vmatmul.mubr.bf16.gmra.mxu0 %v362
        %v495 = vpop.f32.mrf.mxu0
        %v496 = vadd.f32 0.0, %v495
        %v497 = vpop.f32.mrf.mxu0
        %v498 = vpop.f32.mrf.mxu0
        %v499 = vadd.f32 0.0, %v498
        %v500 = vpop.f32.mrf.mxu0
        %501 = vmatprep.mubr.bf16.mxu0 0
        %502 = vmatmul.mubr.bf16.gmra.mxu0 %v363
        %v503 = vpop.f32.mrf.mxu0
        %v504 = vadd.f32 0.0, %v503
        %v505 = vpop.f32.mrf.mxu0
        %v506 = vpop.f32.mrf.mxu0
        %v507 = vadd.f32 0.0, %v506
        %v508 = vpop.f32.mrf.mxu0
        %509 = vmatprep.mubr.bf16.mxu0 0
        %510 = vmatmul.mubr.bf16.gmra.mxu0 %v364
        %v511 = vpop.f32.mrf.mxu0
        %v512 = vadd.f32 0.0, %v511
        %v513 = vpop.f32.mrf.mxu0
        %v514 = vpop.f32.mrf.mxu0
        %v515 = vadd.f32 0.0, %v514
        %v516 = vpop.f32.mrf.mxu0
        %517 = vdwg.mxu0
        %v518 = vpack.c.bf16 %v459, %v456
        %v519 = vpack.c.bf16 %v467, %v464
        %v520 = vpack.c.bf16 %v475, %v472
        %v521 = vpack.c.bf16 %v483, %v480
        %v524 = vunpack.c.l.b16 %v323
        %v525 = vunpack.c.l.b16 %v324
        %v526 = vpack.c.b16 %v525, %v524
        %vm528 = vcmask 130048
        %v530 = vsel %vm528, %v518, 0
        %v533 = vsel %vm528, %v519, 0
        %v536 = vsel %vm528, %v520, 0
        %v539 = vsel %vm528, %v521, 0
        %541 = vmatprep.subr.bf16.mxu0 0
        %542 = vmatpush1.bf16.msra.mxu0 0
        %543 = vmatprep.subr.bf16.mxu0 0
        %544 = vmatpush1.bf16.msra.mxu0 0
        %545 = vmatprep.subr.bf16.mxu0 0
        %546 = vmatpush1.bf16.msra.mxu0 0
        %547 = vmatprep.subr.bf16.mxu0 0
        %548 = vmatpush1.bf16.msra.mxu0 0
        %549 = vmatprep.subr.bf16.mxu0 0
        %550 = vmatpush1.bf16.msra.mxu0 0
        %551 = vmatprep.subr.bf16.mxu0 0
        %552 = vmatpush1.bf16.msra.mxu0 0
        %553 = vmatprep.subr.bf16.mxu0 0
        %554 = vmatpush1.bf16.msra.mxu0 0
        %555 = vmatprep.subr.bf16.mxu0 0
        %556 = vmatpush1.bf16.msra.mxu0 %v526
        %557 = vmatprep.subr.bf16.mxu0 0
        %558 = vmatpush2.bf16.msra.mxu0 0
        %559 = vmatprep.subr.bf16.mxu0 0
        %560 = vmatpush2.bf16.msra.mxu0 0
        %561 = vmatprep.subr.bf16.mxu0 0
        %562 = vmatpush2.bf16.msra.mxu0 0
        %563 = vmatprep.subr.bf16.mxu0 0
        %564 = vmatpush2.bf16.msra.mxu0 0
        %565 = vmatprep.subr.bf16.mxu0 0
        %566 = vmatpush2.bf16.msra.mxu0 0
        %567 = vmatprep.subr.bf16.mxu0 0
        %568 = vmatpush2.bf16.msra.mxu0 0
        %569 = vmatprep.subr.bf16.mxu0 0
        %570 = vmatpush2.bf16.msra.mxu0 0
        %571 = vmatprep.subr.bf16.mxu0 0
        %572 = vmatpush2.bf16.msra.mxu0 0
        %573 = vmatprep.mubr.bf16.mxu0 0
        %574 = vmatmul.mubr.bf16.gmra.mxu0 %v530
        %v575 = vpop.f32.mrf.mxu0
        %v576 = vadd.f32 0.0, %v575
        %v577 = vpop.f32.mrf.mxu0
        %v578 = vpop.f32.mrf.mxu0
        %v579 = vadd.f32 0.0, %v578
        %v580 = vpop.f32.mrf.mxu0
        %581 = vmatprep.mubr.bf16.mxu0 0
        %582 = vmatmul.mubr.bf16.gmra.mxu0 %v533
        %v583 = vpop.f32.mrf.mxu0
        %v584 = vadd.f32 0.0, %v583
        %v585 = vpop.f32.mrf.mxu0
        %v586 = vpop.f32.mrf.mxu0
        %v587 = vadd.f32 0.0, %v586
        %v588 = vpop.f32.mrf.mxu0
        %589 = vmatprep.mubr.bf16.mxu0 0
        %590 = vmatmul.mubr.bf16.gmra.mxu0 %v536
        %v591 = vpop.f32.mrf.mxu0
        %v592 = vadd.f32 0.0, %v591
        %v593 = vpop.f32.mrf.mxu0
        %v594 = vpop.f32.mrf.mxu0
        %v595 = vadd.f32 0.0, %v594
        %v596 = vpop.f32.mrf.mxu0
        %597 = vmatprep.mubr.bf16.mxu0 0
        %598 = vmatmul.mubr.bf16.gmra.mxu0 %v539
        %v599 = vpop.f32.mrf.mxu0
        %v600 = vadd.f32 0.0, %v599
        %v601 = vpop.f32.mrf.mxu0
        %v602 = vpop.f32.mrf.mxu0
        %v603 = vadd.f32 0.0, %v602
        %v604 = vpop.f32.mrf.mxu0
        %605 = vdwg.mxu0
        %v606 = vpack.c.bf16 %v491, %v488
        %v607 = vpack.c.bf16 %v499, %v496
        %v608 = vpack.c.bf16 %v507, %v504
        %v609 = vpack.c.bf16 %v515, %v512
        %v611 = vsel %vm528, %v606, 0
        %v614 = vsel %vm528, %v607, 0
        %v617 = vsel %vm528, %v608, 0
        %v620 = vsel %vm528, %v609, 0
        %622 = vmatprep.subr.bf16.mxu0 0
        %623 = vmatpush1.bf16.msra.mxu0 0
        %624 = vmatprep.subr.bf16.mxu0 0
        %625 = vmatpush1.bf16.msra.mxu0 0
        %626 = vmatprep.subr.bf16.mxu0 0
        %627 = vmatpush1.bf16.msra.mxu0 0
        %628 = vmatprep.subr.bf16.mxu0 0
        %629 = vmatpush1.bf16.msra.mxu0 0
        %630 = vmatprep.subr.bf16.mxu0 0
        %631 = vmatpush1.bf16.msra.mxu0 0
        %632 = vmatprep.subr.bf16.mxu0 0
        %633 = vmatpush1.bf16.msra.mxu0 0
        %634 = vmatprep.subr.bf16.mxu0 0
        %635 = vmatpush1.bf16.msra.mxu0 0
        %636 = vmatprep.subr.bf16.mxu0 0
        %637 = vmatpush1.bf16.msra.mxu0 %v526
        %638 = vmatprep.subr.bf16.mxu0 0
        %639 = vmatpush2.bf16.msra.mxu0 0
        %640 = vmatprep.subr.bf16.mxu0 0
        %641 = vmatpush2.bf16.msra.mxu0 0
        %642 = vmatprep.subr.bf16.mxu0 0
        %643 = vmatpush2.bf16.msra.mxu0 0
        %644 = vmatprep.subr.bf16.mxu0 0
        %645 = vmatpush2.bf16.msra.mxu0 0
        %646 = vmatprep.subr.bf16.mxu0 0
        %647 = vmatpush2.bf16.msra.mxu0 0
        %648 = vmatprep.subr.bf16.mxu0 0
        %649 = vmatpush2.bf16.msra.mxu0 0
        %650 = vmatprep.subr.bf16.mxu0 0
        %651 = vmatpush2.bf16.msra.mxu0 0
        %652 = vmatprep.subr.bf16.mxu0 0
        %653 = vmatpush2.bf16.msra.mxu0 0
        %654 = vmatprep.mubr.bf16.mxu0 0
        %655 = vmatmul.mubr.bf16.gmra.mxu0 %v611
        %v656 = vpop.f32.mrf.mxu0
        %v657 = vadd.f32 0.0, %v656
        %v658 = vpop.f32.mrf.mxu0
        %v659 = vpop.f32.mrf.mxu0
        %v660 = vadd.f32 0.0, %v659
        %v661 = vpop.f32.mrf.mxu0
        %662 = vmatprep.mubr.bf16.mxu0 0
        %663 = vmatmul.mubr.bf16.gmra.mxu0 %v614
        %v664 = vpop.f32.mrf.mxu0
        %v665 = vadd.f32 0.0, %v664
        %v666 = vpop.f32.mrf.mxu0
        %v667 = vpop.f32.mrf.mxu0
        %v668 = vadd.f32 0.0, %v667
        %v669 = vpop.f32.mrf.mxu0
        %670 = vmatprep.mubr.bf16.mxu0 0
        %671 = vmatmul.mubr.bf16.gmra.mxu0 %v617
        %v672 = vpop.f32.mrf.mxu0
        %v673 = vadd.f32 0.0, %v672
        %v674 = vpop.f32.mrf.mxu0
        %v675 = vpop.f32.mrf.mxu0
        %v676 = vadd.f32 0.0, %v675
        %v677 = vpop.f32.mrf.mxu0
        %678 = vmatprep.mubr.bf16.mxu0 0
        %679 = vmatmul.mubr.bf16.gmra.mxu0 %v620
        %v680 = vpop.f32.mrf.mxu0
        %v681 = vadd.f32 0.0, %v680
        %v682 = vpop.f32.mrf.mxu0
        %v683 = vpop.f32.mrf.mxu0
        %v684 = vadd.f32 0.0, %v683
        %v685 = vpop.f32.mrf.mxu0
        %686 = vdwg.mxu0
        %v687 = vld [vmem:[#allocation5] ss:$0 sm:$0xff]
        %v688 = vld [vmem:[#allocation5 + $0x1] ss:$0 sm:$0xff]
        %v689 = vld [vmem:[#allocation5 + $0x2] ss:$0 sm:$0xff]
        %v690 = vadd.f32 %v576, %v687
        %v691 = vadd.f32 %v579, %v687
        %v692 = vadd.f32 %v584, %v687
        %v693 = vadd.f32 %v587, %v687
        %v694 = vadd.f32 %v592, %v687
        %v695 = vadd.f32 %v595, %v687
        %v696 = vadd.f32 %v600, %v687
        %v697 = vadd.f32 %v603, %v687
        %v698 = vadd.f32 %v657, %v687
        %v699 = vadd.f32 %v660, %v687
        %v700 = vadd.f32 %v665, %v687
        %v701 = vadd.f32 %v668, %v687
        %v702 = vadd.f32 %v673, %v687
        %v703 = vadd.f32 %v676, %v687
        %v704 = vadd.f32 %v681, %v687
        %v705 = vadd.f32 %v684, %v687
        %v706 = vmax.f32 %v690, 0.0
        %v707 = vmax.f32 %v691, 0.0
        %v708 = vmax.f32 %v692, 0.0
        %v709 = vmax.f32 %v693, 0.0
        %v710 = vmax.f32 %v694, 0.0
        %v711 = vmax.f32 %v695, 0.0
        %v712 = vmax.f32 %v696, 0.0
        %v713 = vmax.f32 %v697, 0.0
        %v714 = vmax.f32 %v698, 0.0
        %v715 = vmax.f32 %v699, 0.0
        %v716 = vmax.f32 %v700, 0.0
        %v717 = vmax.f32 %v701, 0.0
        %v718 = vmax.f32 %v702, 0.0
        %v719 = vmax.f32 %v703, 0.0
        %v720 = vmax.f32 %v704, 0.0
        %v721 = vmax.f32 %v705, 0.0
        %v722 = vmul.f32 %v706, %v688
        %v723 = vmul.f32 %v707, %v688
        %v724 = vmul.f32 %v708, %v688
        %v725 = vmul.f32 %v709, %v688
        %v726 = vmul.f32 %v710, %v688
        %v727 = vmul.f32 %v711, %v688
        %v728 = vmul.f32 %v712, %v688
        %v729 = vmul.f32 %v713, %v688
        %v730 = vmul.f32 %v714, %v688
        %v731 = vmul.f32 %v715, %v688
        %v732 = vmul.f32 %v716, %v688
        %v733 = vmul.f32 %v717, %v688
        %v734 = vmul.f32 %v718, %v688
        %v735 = vmul.f32 %v719, %v688
        %v736 = vmul.f32 %v720, %v688
        %v737 = vmul.f32 %v721, %v688
        %v738 = vadd.f32 %v722, %v689
        %v739 = vadd.f32 %v723, %v689
        %v740 = vadd.f32 %v724, %v689
        %v741 = vadd.f32 %v725, %v689
        %v742 = vadd.f32 %v726, %v689
        %v743 = vadd.f32 %v727, %v689
        %v744 = vadd.f32 %v728, %v689
        %v745 = vadd.f32 %v729, %v689
        %v746 = vadd.f32 %v730, %v689
        %v747 = vadd.f32 %v731, %v689
        %v748 = vadd.f32 %v732, %v689
        %v749 = vadd.f32 %v733, %v689
        %v750 = vadd.f32 %v734, %v689
        %v751 = vadd.f32 %v735, %v689
        %v752 = vadd.f32 %v736, %v689
        %v753 = vadd.f32 %v737, %v689
        %v754 = vpack.c.bf16 %v739, %v738
        %v755 = vpack.c.bf16 %v741, %v740
        %v756 = vpack.c.bf16 %v743, %v742
        %v757 = vpack.c.bf16 %v745, %v744
        %v758 = vpack.c.bf16 %v747, %v746
        %v759 = vpack.c.bf16 %v749, %v748
        %v760 = vpack.c.bf16 %v751, %v750
        %v761 = vpack.c.bf16 %v753, %v752
        %v762 = vld [vmem:[#allocation2 + $0x10] sm:$0xf]
        %v763 = vld [vmem:[#allocation2 + $0x18] sm:$0xf]
        %v764 = vld [vmem:[#allocation2 + $0x20] sm:$0xf]
        %v765 = vld [vmem:[#allocation2 + $0x28] sm:$0xf]
        %766 = vmatprep.subr.bf16.mxu0 0
        %767 = vmatpush1.bf16.msra.mxu0 %v761
        %768 = vmatprep.subr.bf16.mxu0 0
        %769 = vmatpush1.bf16.msra.mxu0 %v760
        %770 = vmatprep.subr.bf16.mxu0 0
        %771 = vmatpush1.bf16.msra.mxu0 %v759
        %772 = vmatprep.subr.bf16.mxu0 0
        %773 = vmatpush1.bf16.msra.mxu0 %v758
        %774 = vmatprep.subr.bf16.mxu0 0
        %775 = vmatpush1.bf16.msra.mxu0 %v757
        %776 = vmatprep.subr.bf16.mxu0 0
        %777 = vmatpush1.bf16.msra.mxu0 %v756
        %778 = vmatprep.subr.bf16.mxu0 0
        %779 = vmatpush1.bf16.msra.mxu0 %v755
        %780 = vmatprep.subr.bf16.mxu0 0
        %781 = vmatpush1.bf16.msra.mxu0 %v754
        %782 = vmatprep.subr.bf16.mxu0 0
        %783 = vmatpush2.bf16.msra.mxu0 0
        %784 = vmatprep.subr.bf16.mxu0 0
        %785 = vmatpush2.bf16.msra.mxu0 0
        %786 = vmatprep.subr.bf16.mxu0 0
        %787 = vmatpush2.bf16.msra.mxu0 0
        %788 = vmatprep.subr.bf16.mxu0 0
        %789 = vmatpush2.bf16.msra.mxu0 0
        %790 = vmatprep.subr.bf16.mxu0 0
        %791 = vmatpush2.bf16.msra.mxu0 0
        %792 = vmatprep.subr.bf16.mxu0 0
        %793 = vmatpush2.bf16.msra.mxu0 0
        %794 = vmatprep.subr.bf16.mxu0 0
        %795 = vmatpush2.bf16.msra.mxu0 0
        %796 = vmatprep.subr.bf16.mxu0 0
        %797 = vmatpush2.bf16.msra.mxu0 0
        %798 = vmatprep.mubr.bf16.mxu0 0
        %799 = vmatmul.mubr.bf16.gmra.mxu0 %v357
        %v800 = vpop.f32.mrf.mxu0
        %v801 = vadd.f32 0.0, %v800
        %v802 = vpop.f32.mrf.mxu0
        %v803 = vpop.f32.mrf.mxu0
        %v804 = vadd.f32 0.0, %v803
        %v805 = vpop.f32.mrf.mxu0
        %806 = vmatprep.mubr.bf16.mxu0 0
        %807 = vmatmul.mubr.bf16.gmra.mxu0 %v358
        %v808 = vpop.f32.mrf.mxu0
        %v809 = vadd.f32 0.0, %v808
        %v810 = vpop.f32.mrf.mxu0
        %v811 = vpop.f32.mrf.mxu0
        %v812 = vadd.f32 0.0, %v811
        %v813 = vpop.f32.mrf.mxu0
        %814 = vmatprep.mubr.bf16.mxu0 0
        %815 = vmatmul.mubr.bf16.gmra.mxu0 %v359
        %v816 = vpop.f32.mrf.mxu0
        %v817 = vadd.f32 0.0, %v816
        %v818 = vpop.f32.mrf.mxu0
        %v819 = vpop.f32.mrf.mxu0
        %v820 = vadd.f32 0.0, %v819
        %v821 = vpop.f32.mrf.mxu0
        %822 = vmatprep.mubr.bf16.mxu0 0
        %823 = vmatmul.mubr.bf16.gmra.mxu0 %v360
        %v824 = vpop.f32.mrf.mxu0
        %v825 = vadd.f32 0.0, %v824
        %v826 = vpop.f32.mrf.mxu0
        %v827 = vpop.f32.mrf.mxu0
        %v828 = vadd.f32 0.0, %v827
        %v829 = vpop.f32.mrf.mxu0
        %830 = vmatprep.mubr.bf16.mxu0 0
        %831 = vmatmul.mubr.bf16.gmra.mxu0 %v361
        %v832 = vpop.f32.mrf.mxu0
        %v833 = vadd.f32 0.0, %v832
        %v834 = vpop.f32.mrf.mxu0
        %v835 = vpop.f32.mrf.mxu0
        %v836 = vadd.f32 0.0, %v835
        %v837 = vpop.f32.mrf.mxu0
        %838 = vmatprep.mubr.bf16.mxu0 0
        %839 = vmatmul.mubr.bf16.gmra.mxu0 %v362
        %v840 = vpop.f32.mrf.mxu0
        %v841 = vadd.f32 0.0, %v840
        %v842 = vpop.f32.mrf.mxu0
        %v843 = vpop.f32.mrf.mxu0
        %v844 = vadd.f32 0.0, %v843
        %v845 = vpop.f32.mrf.mxu0
        %846 = vmatprep.mubr.bf16.mxu0 0
        %847 = vmatmul.mubr.bf16.gmra.mxu0 %v363
        %v848 = vpop.f32.mrf.mxu0
        %v849 = vadd.f32 0.0, %v848
        %v850 = vpop.f32.mrf.mxu0
        %v851 = vpop.f32.mrf.mxu0
        %v852 = vadd.f32 0.0, %v851
        %v853 = vpop.f32.mrf.mxu0
        %854 = vmatprep.mubr.bf16.mxu0 0
        %855 = vmatmul.mubr.bf16.gmra.mxu0 %v364
        %v856 = vpop.f32.mrf.mxu0
        %v857 = vadd.f32 0.0, %v856
        %v858 = vpop.f32.mrf.mxu0
        %v859 = vpop.f32.mrf.mxu0
        %v860 = vadd.f32 0.0, %v859
        %v861 = vpop.f32.mrf.mxu0
        %862 = vdwg.mxu0
        %v863 = vpack.c.bf16 %v804, %v801
        %v864 = vpack.c.bf16 %v812, %v809
        %v865 = vpack.c.bf16 %v820, %v817
        %v866 = vpack.c.bf16 %v828, %v825
        %v871 = vunpack.c.l.b16 %v762
        %v872 = vunpack.c.l.b16 %v763
        %v873 = vunpack.c.l.b16 %v764
        %v874 = vunpack.c.l.b16 %v765
        %v875 = vpack.c.b16 %v872, %v871
        %v876 = vpack.c.b16 %v874, %v873
        %vm879 = vcmask 261120
        %v881 = vsel %vm879, %v863, 0
        %v884 = vsel %vm879, %v864, 0
        %v887 = vsel %vm879, %v865, 0
        %v890 = vsel %vm879, %v866, 0
        %892 = vmatprep.subr.bf16.mxu0 0
        %893 = vmatpush1.bf16.msra.mxu0 0
        %894 = vmatprep.subr.bf16.mxu0 0
        %895 = vmatpush1.bf16.msra.mxu0 0
        %896 = vmatprep.subr.bf16.mxu0 0
        %897 = vmatpush1.bf16.msra.mxu0 0
        %898 = vmatprep.subr.bf16.mxu0 0
        %899 = vmatpush1.bf16.msra.mxu0 0
        %900 = vmatprep.subr.bf16.mxu0 0
        %901 = vmatpush1.bf16.msra.mxu0 0
        %902 = vmatprep.subr.bf16.mxu0 0
        %903 = vmatpush1.bf16.msra.mxu0 0
        %904 = vmatprep.subr.bf16.mxu0 0
        %905 = vmatpush1.bf16.msra.mxu0 %v876
        %906 = vmatprep.subr.bf16.mxu0 0
        %907 = vmatpush1.bf16.msra.mxu0 %v875
        %908 = vmatprep.subr.bf16.mxu0 0
        %909 = vmatpush2.bf16.msra.mxu0 0
        %910 = vmatprep.subr.bf16.mxu0 0
        %911 = vmatpush2.bf16.msra.mxu0 0
        %912 = vmatprep.subr.bf16.mxu0 0
        %913 = vmatpush2.bf16.msra.mxu0 0
        %914 = vmatprep.subr.bf16.mxu0 0
        %915 = vmatpush2.bf16.msra.mxu0 0
        %916 = vmatprep.subr.bf16.mxu0 0
        %917 = vmatpush2.bf16.msra.mxu0 0
        %918 = vmatprep.subr.bf16.mxu0 0
        %919 = vmatpush2.bf16.msra.mxu0 0
        %920 = vmatprep.subr.bf16.mxu0 0
        %921 = vmatpush2.bf16.msra.mxu0 0
        %922 = vmatprep.subr.bf16.mxu0 0
        %923 = vmatpush2.bf16.msra.mxu0 0
        %924 = vmatprep.mubr.bf16.mxu0 0
        %925 = vmatmul.mubr.bf16.gmra.mxu0 %v881
        %v926 = vpop.f32.mrf.mxu0
        %v927 = vadd.f32 0.0, %v926
        %v928 = vpop.f32.mrf.mxu0
        %v929 = vpop.f32.mrf.mxu0
        %v930 = vadd.f32 0.0, %v929
        %v931 = vpop.f32.mrf.mxu0
        %932 = vmatprep.mubr.bf16.mxu0 0
        %933 = vmatmul.mubr.bf16.gmra.mxu0 %v884
        %v934 = vpop.f32.mrf.mxu0
        %v935 = vadd.f32 0.0, %v934
        %v936 = vpop.f32.mrf.mxu0
        %v937 = vpop.f32.mrf.mxu0
        %v938 = vadd.f32 0.0, %v937
        %v939 = vpop.f32.mrf.mxu0
        %940 = vmatprep.mubr.bf16.mxu0 0
        %941 = vmatmul.mubr.bf16.gmra.mxu0 %v887
        %v942 = vpop.f32.mrf.mxu0
        %v943 = vadd.f32 0.0, %v942
        %v944 = vpop.f32.mrf.mxu0
        %v945 = vpop.f32.mrf.mxu0
        %v946 = vadd.f32 0.0, %v945
        %v947 = vpop.f32.mrf.mxu0
        %948 = vmatprep.mubr.bf16.mxu0 0
        %949 = vmatmul.mubr.bf16.gmra.mxu0 %v890
        %v950 = vpop.f32.mrf.mxu0
        %v951 = vadd.f32 0.0, %v950
        %v952 = vpop.f32.mrf.mxu0
        %v953 = vpop.f32.mrf.mxu0
        %v954 = vadd.f32 0.0, %v953
        %v955 = vpop.f32.mrf.mxu0
        %956 = vdwg.mxu0
        %v957 = vpack.c.bf16 %v836, %v833
        %v958 = vpack.c.bf16 %v844, %v841
        %v959 = vpack.c.bf16 %v852, %v849
        %v960 = vpack.c.bf16 %v860, %v857
        %v962 = vsel %vm879, %v957, 0
        %v965 = vsel %vm879, %v958, 0
        %v968 = vsel %vm879, %v959, 0
        %v971 = vsel %vm879, %v960, 0
        %973 = vmatprep.subr.bf16.mxu0 0
        %974 = vmatpush1.bf16.msra.mxu0 0
        %975 = vmatprep.subr.bf16.mxu0 0
        %976 = vmatpush1.bf16.msra.mxu0 0
        %977 = vmatprep.subr.bf16.mxu0 0
        %978 = vmatpush1.bf16.msra.mxu0 0
        %979 = vmatprep.subr.bf16.mxu0 0
        %980 = vmatpush1.bf16.msra.mxu0 0
        %981 = vmatprep.subr.bf16.mxu0 0
        %982 = vmatpush1.bf16.msra.mxu0 0
        %983 = vmatprep.subr.bf16.mxu0 0
        %984 = vmatpush1.bf16.msra.mxu0 0
        %985 = vmatprep.subr.bf16.mxu0 0
        %986 = vmatpush1.bf16.msra.mxu0 %v876
        %987 = vmatprep.subr.bf16.mxu0 0
        %988 = vmatpush1.bf16.msra.mxu0 %v875
        %989 = vmatprep.subr.bf16.mxu0 0
        %990 = vmatpush2.bf16.msra.mxu0 0
        %991 = vmatprep.subr.bf16.mxu0 0
        %992 = vmatpush2.bf16.msra.mxu0 0
        %993 = vmatprep.subr.bf16.mxu0 0
        %994 = vmatpush2.bf16.msra.mxu0 0
        %995 = vmatprep.subr.bf16.mxu0 0
        %996 = vmatpush2.bf16.msra.mxu0 0
        %997 = vmatprep.subr.bf16.mxu0 0
        %998 = vmatpush2.bf16.msra.mxu0 0
        %999 = vmatprep.subr.bf16.mxu0 0
        %1000 = vmatpush2.bf16.msra.mxu0 0
        %1001 = vmatprep.subr.bf16.mxu0 0
        %1002 = vmatpush2.bf16.msra.mxu0 0
        %1003 = vmatprep.subr.bf16.mxu0 0
        %1004 = vmatpush2.bf16.msra.mxu0 0
        %1005 = vmatprep.mubr.bf16.mxu0 0
        %1006 = vmatmul.mubr.bf16.gmra.mxu0 %v962
        %v1007 = vpop.f32.mrf.mxu0
        %v1008 = vadd.f32 0.0, %v1007
        %v1009 = vpop.f32.mrf.mxu0
        %v1010 = vpop.f32.mrf.mxu0
        %v1011 = vadd.f32 0.0, %v1010
        %v1012 = vpop.f32.mrf.mxu0
        %1013 = vmatprep.mubr.bf16.mxu0 0
        %1014 = vmatmul.mubr.bf16.gmra.mxu0 %v965
        %v1015 = vpop.f32.mrf.mxu0
        %v1016 = vadd.f32 0.0, %v1015
        %v1017 = vpop.f32.mrf.mxu0
        %v1018 = vpop.f32.mrf.mxu0
        %v1019 = vadd.f32 0.0, %v1018
        %v1020 = vpop.f32.mrf.mxu0
        %1021 = vmatprep.mubr.bf16.mxu0 0
        %1022 = vmatmul.mubr.bf16.gmra.mxu0 %v968
        %v1023 = vpop.f32.mrf.mxu0
        %v1024 = vadd.f32 0.0, %v1023
        %v1025 = vpop.f32.mrf.mxu0
        %v1026 = vpop.f32.mrf.mxu0
        %v1027 = vadd.f32 0.0, %v1026
        %v1028 = vpop.f32.mrf.mxu0
        %1029 = vmatprep.mubr.bf16.mxu0 0
        %1030 = vmatmul.mubr.bf16.gmra.mxu0 %v971
        %v1031 = vpop.f32.mrf.mxu0
        %v1032 = vadd.f32 0.0, %v1031
        %v1033 = vpop.f32.mrf.mxu0
        %v1034 = vpop.f32.mrf.mxu0
        %v1035 = vadd.f32 0.0, %v1034
        %v1036 = vpop.f32.mrf.mxu0
        %1037 = vdwg.mxu0
        %v1038 = vld [vmem:[#allocation5 + $0x3] ss:$0 sm:$0xff]
        %v1039 = vld [vmem:[#allocation5 + $0x4] ss:$0 sm:$0xff]
        %v1040 = vld [vmem:[#allocation5 + $0x5] ss:$0 sm:$0xff]
        %v1041 = vadd.f32 %v927, %v1038
        %v1042 = vadd.f32 %v930, %v1038
        %v1043 = vadd.f32 %v935, %v1038
        %v1044 = vadd.f32 %v938, %v1038
        %v1045 = vadd.f32 %v943, %v1038
        %v1046 = vadd.f32 %v946, %v1038
        %v1047 = vadd.f32 %v951, %v1038
        %v1048 = vadd.f32 %v954, %v1038
        %v1049 = vadd.f32 %v1008, %v1038
        %v1050 = vadd.f32 %v1011, %v1038
        %v1051 = vadd.f32 %v1016, %v1038
        %v1052 = vadd.f32 %v1019, %v1038
        %v1053 = vadd.f32 %v1024, %v1038
        %v1054 = vadd.f32 %v1027, %v1038
        %v1055 = vadd.f32 %v1032, %v1038
        %v1056 = vadd.f32 %v1035, %v1038
        %v1057 = vmax.f32 %v1041, 0.0
        %v1058 = vmax.f32 %v1042, 0.0
        %v1059 = vmax.f32 %v1043, 0.0
        %v1060 = vmax.f32 %v1044, 0.0
        %v1061 = vmax.f32 %v1045, 0.0
        %v1062 = vmax.f32 %v1046, 0.0
        %v1063 = vmax.f32 %v1047, 0.0
        %v1064 = vmax.f32 %v1048, 0.0
        %v1065 = vmax.f32 %v1049, 0.0
        %v1066 = vmax.f32 %v1050, 0.0
        %v1067 = vmax.f32 %v1051, 0.0
        %v1068 = vmax.f32 %v1052, 0.0
        %v1069 = vmax.f32 %v1053, 0.0
        %v1070 = vmax.f32 %v1054, 0.0
        %v1071 = vmax.f32 %v1055, 0.0
        %v1072 = vmax.f32 %v1056, 0.0
        %v1073 = vmul.f32 %v1057, %v1039
        %v1074 = vmul.f32 %v1058, %v1039
        %v1075 = vmul.f32 %v1059, %v1039
        %v1076 = vmul.f32 %v1060, %v1039
        %v1077 = vmul.f32 %v1061, %v1039
        %v1078 = vmul.f32 %v1062, %v1039
        %v1079 = vmul.f32 %v1063, %v1039
        %v1080 = vmul.f32 %v1064, %v1039
        %v1081 = vmul.f32 %v1065, %v1039
        %v1082 = vmul.f32 %v1066, %v1039
        %v1083 = vmul.f32 %v1067, %v1039
        %v1084 = vmul.f32 %v1068, %v1039
        %v1085 = vmul.f32 %v1069, %v1039
        %v1086 = vmul.f32 %v1070, %v1039
        %v1087 = vmul.f32 %v1071, %v1039
        %v1088 = vmul.f32 %v1072, %v1039
        %v1089 = vadd.f32 %v1073, %v1040
        %v1090 = vadd.f32 %v1074, %v1040
        %v1091 = vadd.f32 %v1075, %v1040
        %v1092 = vadd.f32 %v1076, %v1040
        %v1093 = vadd.f32 %v1077, %v1040
        %v1094 = vadd.f32 %v1078, %v1040
        %v1095 = vadd.f32 %v1079, %v1040
        %v1096 = vadd.f32 %v1080, %v1040
        %v1097 = vadd.f32 %v1081, %v1040
        %v1098 = vadd.f32 %v1082, %v1040
        %v1099 = vadd.f32 %v1083, %v1040
        %v1100 = vadd.f32 %v1084, %v1040
        %v1101 = vadd.f32 %v1085, %v1040
        %v1102 = vadd.f32 %v1086, %v1040
        %v1103 = vadd.f32 %v1087, %v1040
        %v1104 = vadd.f32 %v1088, %v1040
        %v1105 = vpack.c.bf16 %v1090, %v1089
        %v1106 = vpack.c.bf16 %v1092, %v1091
        %v1107 = vpack.c.bf16 %v1094, %v1093
        %v1108 = vpack.c.bf16 %v1096, %v1095
        %v1109 = vpack.c.bf16 %v1098, %v1097
        %v1110 = vpack.c.bf16 %v1100, %v1099
        %v1111 = vpack.c.bf16 %v1102, %v1101
        %v1112 = vpack.c.bf16 %v1104, %v1103
        %v1113 = vld [vmem:[#allocation2 + $0x30] sm:$0xf]
        %v1114 = vld [vmem:[#allocation2 + $0x38] sm:$0xf]
        %v1115 = vld [vmem:[#allocation2 + $0x40] sm:$0xf]
        %v1116 = vld [vmem:[#allocation2 + $0x48] sm:$0xf]
        %v1117 = vld [vmem:[#allocation2 + $0x50] sm:$0xf]
        %v1118 = vld [vmem:[#allocation2 + $0x58] sm:$0xf]
        %v1119 = vld [vmem:[#allocation2 + $0x60] sm:$0xf]
        %v1120 = vld [vmem:[#allocation2 + $0x68] sm:$0xf]
        %1121 = vmatprep.subr.bf16.mxu0 0
        %1122 = vmatpush1.bf16.msra.mxu0 %v1112
        %1123 = vmatprep.subr.bf16.mxu0 0
        %1124 = vmatpush1.bf16.msra.mxu0 %v1111
        %1125 = vmatprep.subr.bf16.mxu0 0
        %1126 = vmatpush1.bf16.msra.mxu0 %v1110
        %1127 = vmatprep.subr.bf16.mxu0 0
        %1128 = vmatpush1.bf16.msra.mxu0 %v1109
        %1129 = vmatprep.subr.bf16.mxu0 0
        %1130 = vmatpush1.bf16.msra.mxu0 %v1108
        %1131 = vmatprep.subr.bf16.mxu0 0
        %1132 = vmatpush1.bf16.msra.mxu0 %v1107
        %1133 = vmatprep.subr.bf16.mxu0 0
        %1134 = vmatpush1.bf16.msra.mxu0 %v1106
        %1135 = vmatprep.subr.bf16.mxu0 0
        %1136 = vmatpush1.bf16.msra.mxu0 %v1105
        %1137 = vmatprep.subr.bf16.mxu0 0
        %1138 = vmatpush2.bf16.msra.mxu0 0
        %1139 = vmatprep.subr.bf16.mxu0 0
        %1140 = vmatpush2.bf16.msra.mxu0 0
        %1141 = vmatprep.subr.bf16.mxu0 0
        %1142 = vmatpush2.bf16.msra.mxu0 0
        %1143 = vmatprep.subr.bf16.mxu0 0
        %1144 = vmatpush2.bf16.msra.mxu0 0
        %1145 = vmatprep.subr.bf16.mxu0 0
        %1146 = vmatpush2.bf16.msra.mxu0 0
        %1147 = vmatprep.subr.bf16.mxu0 0
        %1148 = vmatpush2.bf16.msra.mxu0 0
        %1149 = vmatprep.subr.bf16.mxu0 0
        %1150 = vmatpush2.bf16.msra.mxu0 0
        %1151 = vmatprep.subr.bf16.mxu0 0
        %1152 = vmatpush2.bf16.msra.mxu0 0
        %1153 = vmatprep.mubr.bf16.mxu0 0
        %1154 = vmatmul.mubr.bf16.gmra.mxu0 %v357
        %v1155 = vpop.f32.mrf.mxu0
        %v1156 = vadd.f32 0.0, %v1155
        %v1157 = vpop.f32.mrf.mxu0
        %v1158 = vpop.f32.mrf.mxu0
        %v1159 = vadd.f32 0.0, %v1158
        %v1160 = vpop.f32.mrf.mxu0
        %1161 = vmatprep.mubr.bf16.mxu0 0
        %1162 = vmatmul.mubr.bf16.gmra.mxu0 %v358
        %v1163 = vpop.f32.mrf.mxu0
        %v1164 = vadd.f32 0.0, %v1163
        %v1165 = vpop.f32.mrf.mxu0
        %v1166 = vpop.f32.mrf.mxu0
        %v1167 = vadd.f32 0.0, %v1166
        %v1168 = vpop.f32.mrf.mxu0
        %1169 = vmatprep.mubr.bf16.mxu0 0
        %1170 = vmatmul.mubr.bf16.gmra.mxu0 %v359
        %v1171 = vpop.f32.mrf.mxu0
        %v1172 = vadd.f32 0.0, %v1171
        %v1173 = vpop.f32.mrf.mxu0
        %v1174 = vpop.f32.mrf.mxu0
        %v1175 = vadd.f32 0.0, %v1174
        %v1176 = vpop.f32.mrf.mxu0
        %1177 = vmatprep.mubr.bf16.mxu0 0
        %1178 = vmatmul.mubr.bf16.gmra.mxu0 %v360
        %v1179 = vpop.f32.mrf.mxu0
        %v1180 = vadd.f32 0.0, %v1179
        %v1181 = vpop.f32.mrf.mxu0
        %v1182 = vpop.f32.mrf.mxu0
        %v1183 = vadd.f32 0.0, %v1182
        %v1184 = vpop.f32.mrf.mxu0
        %1185 = vmatprep.mubr.bf16.mxu0 0
        %1186 = vmatmul.mubr.bf16.gmra.mxu0 %v361
        %v1187 = vpop.f32.mrf.mxu0
        %v1188 = vadd.f32 0.0, %v1187
        %v1189 = vpop.f32.mrf.mxu0
        %v1190 = vpop.f32.mrf.mxu0
        %v1191 = vadd.f32 0.0, %v1190
        %v1192 = vpop.f32.mrf.mxu0
        %1193 = vmatprep.mubr.bf16.mxu0 0
        %1194 = vmatmul.mubr.bf16.gmra.mxu0 %v362
        %v1195 = vpop.f32.mrf.mxu0
        %v1196 = vadd.f32 0.0, %v1195
        %v1197 = vpop.f32.mrf.mxu0
        %v1198 = vpop.f32.mrf.mxu0
        %v1199 = vadd.f32 0.0, %v1198
        %v1200 = vpop.f32.mrf.mxu0
        %1201 = vmatprep.mubr.bf16.mxu0 0
        %1202 = vmatmul.mubr.bf16.gmra.mxu0 %v363
        %v1203 = vpop.f32.mrf.mxu0
        %v1204 = vadd.f32 0.0, %v1203
        %v1205 = vpop.f32.mrf.mxu0
        %v1206 = vpop.f32.mrf.mxu0
        %v1207 = vadd.f32 0.0, %v1206
        %v1208 = vpop.f32.mrf.mxu0
        %1209 = vmatprep.mubr.bf16.mxu0 0
        %1210 = vmatmul.mubr.bf16.gmra.mxu0 %v364
        %v1211 = vpop.f32.mrf.mxu0
        %v1212 = vadd.f32 0.0, %v1211
        %v1213 = vpop.f32.mrf.mxu0
        %v1214 = vpop.f32.mrf.mxu0
        %v1215 = vadd.f32 0.0, %v1214
        %v1216 = vpop.f32.mrf.mxu0
        %1217 = vdwg.mxu0
        %v1218 = vpack.c.bf16 %v1159, %v1156
        %v1219 = vpack.c.bf16 %v1167, %v1164
        %v1220 = vpack.c.bf16 %v1175, %v1172
        %v1221 = vpack.c.bf16 %v1183, %v1180
        %v1230 = vunpack.c.l.b16 %v1113
        %v1231 = vunpack.c.l.b16 %v1114
        %v1232 = vunpack.c.l.b16 %v1115
        %v1233 = vunpack.c.l.b16 %v1116
        %v1234 = vunpack.c.l.b16 %v1117
        %v1235 = vunpack.c.l.b16 %v1118
        %v1236 = vunpack.c.l.b16 %v1119
        %v1237 = vunpack.c.l.b16 %v1120
        %v1238 = vpack.c.b16 %v1231, %v1230
        %v1239 = vpack.c.b16 %v1233, %v1232
        %v1240 = vpack.c.b16 %v1235, %v1234
        %v1241 = vpack.c.b16 %v1237, %v1236
        %vm1246 = vcmask 523264
        %v1248 = vsel %vm1246, %v1218, 0
        %v1251 = vsel %vm1246, %v1219, 0
        %v1254 = vsel %vm1246, %v1220, 0
        %v1257 = vsel %vm1246, %v1221, 0
        %1259 = vmatprep.subr.bf16.mxu0 0
        %1260 = vmatpush1.bf16.msra.mxu0 0
        %1261 = vmatprep.subr.bf16.mxu0 0
        %1262 = vmatpush1.bf16.msra.mxu0 0
        %1263 = vmatprep.subr.bf16.mxu0 0
        %1264 = vmatpush1.bf16.msra.mxu0 0
        %1265 = vmatprep.subr.bf16.mxu0 0
        %1266 = vmatpush1.bf16.msra.mxu0 0
        %1267 = vmatprep.subr.bf16.mxu0 0
        %1268 = vmatpush1.bf16.msra.mxu0 %v1241
        %1269 = vmatprep.subr.bf16.mxu0 0
        %1270 = vmatpush1.bf16.msra.mxu0 %v1240
        %1271 = vmatprep.subr.bf16.mxu0 0
        %1272 = vmatpush1.bf16.msra.mxu0 %v1239
        %1273 = vmatprep.subr.bf16.mxu0 0
        %1274 = vmatpush1.bf16.msra.mxu0 %v1238
        %1275 = vmatprep.subr.bf16.mxu0 0
        %1276 = vmatpush2.bf16.msra.mxu0 0
        %1277 = vmatprep.subr.bf16.mxu0 0
        %1278 = vmatpush2.bf16.msra.mxu0 0
        %1279 = vmatprep.subr.bf16.mxu0 0
        %1280 = vmatpush2.bf16.msra.mxu0 0
        %1281 = vmatprep.subr.bf16.mxu0 0
        %1282 = vmatpush2.bf16.msra.mxu0 0
        %1283 = vmatprep.subr.bf16.mxu0 0
        %1284 = vmatpush2.bf16.msra.mxu0 0
        %1285 = vmatprep.subr.bf16.mxu0 0
        %1286 = vmatpush2.bf16.msra.mxu0 0
        %1287 = vmatprep.subr.bf16.mxu0 0
        %1288 = vmatpush2.bf16.msra.mxu0 0
        %1289 = vmatprep.subr.bf16.mxu0 0
        %1290 = vmatpush2.bf16.msra.mxu0 0
        %1291 = vmatprep.mubr.bf16.mxu0 0
        %1292 = vmatmul.mubr.bf16.gmra.mxu0 %v1248
        %v1293 = vpop.f32.mrf.mxu0
        %v1294 = vadd.f32 0.0, %v1293
        %v1295 = vpop.f32.mrf.mxu0
        %v1296 = vpop.f32.mrf.mxu0
        %v1297 = vadd.f32 0.0, %v1296
        %v1298 = vpop.f32.mrf.mxu0
        %1299 = vmatprep.mubr.bf16.mxu0 0
        %1300 = vmatmul.mubr.bf16.gmra.mxu0 %v1251
        %v1301 = vpop.f32.mrf.mxu0
        %v1302 = vadd.f32 0.0, %v1301
        %v1303 = vpop.f32.mrf.mxu0
        %v1304 = vpop.f32.mrf.mxu0
        %v1305 = vadd.f32 0.0, %v1304
        %v1306 = vpop.f32.mrf.mxu0
        %1307 = vmatprep.mubr.bf16.mxu0 0
        %1308 = vmatmul.mubr.bf16.gmra.mxu0 %v1254
        %v1309 = vpop.f32.mrf.mxu0
        %v1310 = vadd.f32 0.0, %v1309
        %v1311 = vpop.f32.mrf.mxu0
        %v1312 = vpop.f32.mrf.mxu0
        %v1313 = vadd.f32 0.0, %v1312
        %v1314 = vpop.f32.mrf.mxu0
        %1315 = vmatprep.mubr.bf16.mxu0 0
        %1316 = vmatmul.mubr.bf16.gmra.mxu0 %v1257
        %v1317 = vpop.f32.mrf.mxu0
        %v1318 = vadd.f32 0.0, %v1317
        %v1319 = vpop.f32.mrf.mxu0
        %v1320 = vpop.f32.mrf.mxu0
        %v1321 = vadd.f32 0.0, %v1320
        %v1322 = vpop.f32.mrf.mxu0
        %1323 = vdwg.mxu0
        %v1324 = vpack.c.bf16 %v1191, %v1188
        %v1325 = vpack.c.bf16 %v1199, %v1196
        %v1326 = vpack.c.bf16 %v1207, %v1204
        %v1327 = vpack.c.bf16 %v1215, %v1212
        %v1329 = vsel %vm1246, %v1324, 0
        %v1332 = vsel %vm1246, %v1325, 0
        %v1335 = vsel %vm1246, %v1326, 0
        %v1338 = vsel %vm1246, %v1327, 0
        %1340 = vmatprep.subr.bf16.mxu0 0
        %1341 = vmatpush1.bf16.msra.mxu0 0
        %1342 = vmatprep.subr.bf16.mxu0 0
        %1343 = vmatpush1.bf16.msra.mxu0 0
        %1344 = vmatprep.subr.bf16.mxu0 0
        %1345 = vmatpush1.bf16.msra.mxu0 0
        %1346 = vmatprep.subr.bf16.mxu0 0
        %1347 = vmatpush1.bf16.msra.mxu0 0
        %1348 = vmatprep.subr.bf16.mxu0 0
        %1349 = vmatpush1.bf16.msra.mxu0 %v1241
        %1350 = vmatprep.subr.bf16.mxu0 0
        %1351 = vmatpush1.bf16.msra.mxu0 %v1240
        %1352 = vmatprep.subr.bf16.mxu0 0
        %1353 = vmatpush1.bf16.msra.mxu0 %v1239
        %1354 = vmatprep.subr.bf16.mxu0 0
        %1355 = vmatpush1.bf16.msra.mxu0 %v1238
        %1356 = vmatprep.subr.bf16.mxu0 0
        %1357 = vmatpush2.bf16.msra.mxu0 0
        %1358 = vmatprep.subr.bf16.mxu0 0
        %1359 = vmatpush2.bf16.msra.mxu0 0
        %1360 = vmatprep.subr.bf16.mxu0 0
        %1361 = vmatpush2.bf16.msra.mxu0 0
        %1362 = vmatprep.subr.bf16.mxu0 0
        %1363 = vmatpush2.bf16.msra.mxu0 0
        %1364 = vmatprep.subr.bf16.mxu0 0
        %1365 = vmatpush2.bf16.msra.mxu0 0
        %1366 = vmatprep.subr.bf16.mxu0 0
        %1367 = vmatpush2.bf16.msra.mxu0 0
        %1368 = vmatprep.subr.bf16.mxu0 0
        %1369 = vmatpush2.bf16.msra.mxu0 0
        %1370 = vmatprep.subr.bf16.mxu0 0
        %1371 = vmatpush2.bf16.msra.mxu0 0
        %1372 = vmatprep.mubr.bf16.mxu0 0
        %1373 = vmatmul.mubr.bf16.gmra.mxu0 %v1329
        %v1374 = vpop.f32.mrf.mxu0
        %v1375 = vadd.f32 0.0, %v1374
        %v1376 = vpop.f32.mrf.mxu0
        %v1377 = vpop.f32.mrf.mxu0
        %v1378 = vadd.f32 0.0, %v1377
        %v1379 = vpop.f32.mrf.mxu0
        %1380 = vmatprep.mubr.bf16.mxu0 0
        %1381 = vmatmul.mubr.bf16.gmra.mxu0 %v1332
        %v1382 = vpop.f32.mrf.mxu0
        %v1383 = vadd.f32 0.0, %v1382
        %v1384 = vpop.f32.mrf.mxu0
        %v1385 = vpop.f32.mrf.mxu0
        %v1386 = vadd.f32 0.0, %v1385
        %v1387 = vpop.f32.mrf.mxu0
        %1388 = vmatprep.mubr.bf16.mxu0 0
        %1389 = vmatmul.mubr.bf16.gmra.mxu0 %v1335
        %v1390 = vpop.f32.mrf.mxu0
        %v1391 = vadd.f32 0.0, %v1390
        %v1392 = vpop.f32.mrf.mxu0
        %v1393 = vpop.f32.mrf.mxu0
        %v1394 = vadd.f32 0.0, %v1393
        %v1395 = vpop.f32.mrf.mxu0
        %1396 = vmatprep.mubr.bf16.mxu0 0
        %1397 = vmatmul.mubr.bf16.gmra.mxu0 %v1338
        %v1398 = vpop.f32.mrf.mxu0
        %v1399 = vadd.f32 0.0, %v1398
        %v1400 = vpop.f32.mrf.mxu0
        %v1401 = vpop.f32.mrf.mxu0
        %v1402 = vadd.f32 0.0, %v1401
        %v1403 = vpop.f32.mrf.mxu0
        %1404 = vdwg.mxu0
        %v1405 = vld [vmem:[#allocation5 + $0x6] ss:$0 sm:$0xff]
        %v1406 = vld [vmem:[#allocation5 + $0x7] ss:$0 sm:$0xff]
        %v1407 = vld [vmem:[#allocation5 + $0x10] ss:$0 sm:$0xff]
        %v1408 = vadd.f32 %v1294, %v1405
        %v1409 = vadd.f32 %v1297, %v1405
        %v1410 = vadd.f32 %v1302, %v1405
        %v1411 = vadd.f32 %v1305, %v1405
        %v1412 = vadd.f32 %v1310, %v1405
        %v1413 = vadd.f32 %v1313, %v1405
        %v1414 = vadd.f32 %v1318, %v1405
        %v1415 = vadd.f32 %v1321, %v1405
        %v1416 = vadd.f32 %v1375, %v1405
        %v1417 = vadd.f32 %v1378, %v1405
        %v1418 = vadd.f32 %v1383, %v1405
        %v1419 = vadd.f32 %v1386, %v1405
        %v1420 = vadd.f32 %v1391, %v1405
        %v1421 = vadd.f32 %v1394, %v1405
        %v1422 = vadd.f32 %v1399, %v1405
        %v1423 = vadd.f32 %v1402, %v1405
        %v1424 = vmax.f32 %v1408, 0.0
        %v1425 = vmax.f32 %v1409, 0.0
        %v1426 = vmax.f32 %v1410, 0.0
        %v1427 = vmax.f32 %v1411, 0.0
        %v1428 = vmax.f32 %v1412, 0.0
        %v1429 = vmax.f32 %v1413, 0.0
        %v1430 = vmax.f32 %v1414, 0.0
        %v1431 = vmax.f32 %v1415, 0.0
        %v1432 = vmax.f32 %v1416, 0.0
        %v1433 = vmax.f32 %v1417, 0.0
        %v1434 = vmax.f32 %v1418, 0.0
        %v1435 = vmax.f32 %v1419, 0.0
        %v1436 = vmax.f32 %v1420, 0.0
        %v1437 = vmax.f32 %v1421, 0.0
        %v1438 = vmax.f32 %v1422, 0.0
        %v1439 = vmax.f32 %v1423, 0.0
        %v1440 = vmul.f32 %v1424, %v1406
        %v1441 = vmul.f32 %v1425, %v1406
        %v1442 = vmul.f32 %v1426, %v1406
        %v1443 = vmul.f32 %v1427, %v1406
        %v1444 = vmul.f32 %v1428, %v1406
        %v1445 = vmul.f32 %v1429, %v1406
        %v1446 = vmul.f32 %v1430, %v1406
        %v1447 = vmul.f32 %v1431, %v1406
        %v1448 = vmul.f32 %v1432, %v1406
        %v1449 = vmul.f32 %v1433, %v1406
        %v1450 = vmul.f32 %v1434, %v1406
        %v1451 = vmul.f32 %v1435, %v1406
        %v1452 = vmul.f32 %v1436, %v1406
        %v1453 = vmul.f32 %v1437, %v1406
        %v1454 = vmul.f32 %v1438, %v1406
        %v1455 = vmul.f32 %v1439, %v1406
        %v1456 = vadd.f32 %v1440, %v1407
        %v1457 = vadd.f32 %v1441, %v1407
        %v1458 = vadd.f32 %v1442, %v1407
        %v1459 = vadd.f32 %v1443, %v1407
        %v1460 = vadd.f32 %v1444, %v1407
        %v1461 = vadd.f32 %v1445, %v1407
        %v1462 = vadd.f32 %v1446, %v1407
        %v1463 = vadd.f32 %v1447, %v1407
        %v1464 = vadd.f32 %v1448, %v1407
        %v1465 = vadd.f32 %v1449, %v1407
        %v1466 = vadd.f32 %v1450, %v1407
        %v1467 = vadd.f32 %v1451, %v1407
        %v1468 = vadd.f32 %v1452, %v1407
        %v1469 = vadd.f32 %v1453, %v1407
        %v1470 = vadd.f32 %v1454, %v1407
        %v1471 = vadd.f32 %v1455, %v1407
        %v1472 = vpack.c.bf16 %v1457, %v1456
        %v1473 = vpack.c.bf16 %v1459, %v1458
        %v1474 = vpack.c.bf16 %v1461, %v1460
        %v1475 = vpack.c.bf16 %v1463, %v1462
        %v1476 = vpack.c.bf16 %v1465, %v1464
        %v1477 = vpack.c.bf16 %v1467, %v1466
        %v1478 = vpack.c.bf16 %v1469, %v1468
        %v1479 = vpack.c.bf16 %v1471, %v1470
        %v1480 = vld [vmem:[#allocation2 + $0x70] sm:$0xf]
        %v1481 = vld [vmem:[#allocation2 + $0x78] sm:$0xf]
        %v1482 = vld [vmem:[#allocation2 + $0x80] sm:$0xf]
        %v1483 = vld [vmem:[#allocation2 + $0x88] sm:$0xf]
        %v1484 = vld [vmem:[#allocation2 + $0x90] sm:$0xf]
        %v1485 = vld [vmem:[#allocation2 + $0x98] sm:$0xf]
        %v1486 = vld [vmem:[#allocation2 + $0xa0] sm:$0xf]
        %v1487 = vld [vmem:[#allocation2 + $0xa8] sm:$0xf]
        %v1488 = vld [vmem:[#allocation2 + $0xb0] sm:$0xf]
        %v1489 = vld [vmem:[#allocation2 + $0xb8] sm:$0xf]
        %v1490 = vld [vmem:[#allocation2 + $0xc0] sm:$0xf]
        %v1491 = vld [vmem:[#allocation2 + $0xc8] sm:$0xf]
        %v1492 = vld [vmem:[#allocation2 + $0xd0] sm:$0xf]
        %v1493 = vld [vmem:[#allocation2 + $0xd8] sm:$0xf]
        %v1494 = vld [vmem:[#allocation2 + $0xe0] sm:$0xf]
        %v1495 = vld [vmem:[#allocation2 + $0xe8] sm:$0xf]
        %1496 = vmatprep.subr.bf16.mxu0 0
        %1497 = vmatpush1.bf16.msra.mxu0 %v1479
        %1498 = vmatprep.subr.bf16.mxu0 0
        %1499 = vmatpush1.bf16.msra.mxu0 %v1478
        %1500 = vmatprep.subr.bf16.mxu0 0
        %1501 = vmatpush1.bf16.msra.mxu0 %v1477
        %1502 = vmatprep.subr.bf16.mxu0 0
        %1503 = vmatpush1.bf16.msra.mxu0 %v1476
        %1504 = vmatprep.subr.bf16.mxu0 0
        %1505 = vmatpush1.bf16.msra.mxu0 %v1475
        %1506 = vmatprep.subr.bf16.mxu0 0
        %1507 = vmatpush1.bf16.msra.mxu0 %v1474
        %1508 = vmatprep.subr.bf16.mxu0 0
        %1509 = vmatpush1.bf16.msra.mxu0 %v1473
        %1510 = vmatprep.subr.bf16.mxu0 0
        %1511 = vmatpush1.bf16.msra.mxu0 %v1472
        %1512 = vmatprep.subr.bf16.mxu0 0
        %1513 = vmatpush2.bf16.msra.mxu0 0
        %1514 = vmatprep.subr.bf16.mxu0 0
        %1515 = vmatpush2.bf16.msra.mxu0 0
        %1516 = vmatprep.subr.bf16.mxu0 0
        %1517 = vmatpush2.bf16.msra.mxu0 0
        %1518 = vmatprep.subr.bf16.mxu0 0
        %1519 = vmatpush2.bf16.msra.mxu0 0
        %1520 = vmatprep.subr.bf16.mxu0 0
        %1521 = vmatpush2.bf16.msra.mxu0 0
        %1522 = vmatprep.subr.bf16.mxu0 0
        %1523 = vmatpush2.bf16.msra.mxu0 0
        %1524 = vmatprep.subr.bf16.mxu0 0
        %1525 = vmatpush2.bf16.msra.mxu0 0
        %1526 = vmatprep.subr.bf16.mxu0 0
        %1527 = vmatpush2.bf16.msra.mxu0 0
        %1528 = vmatprep.mubr.bf16.mxu0 0
        %1529 = vmatmul.mubr.bf16.gmra.mxu0 %v357
        %v1530 = vpop.f32.mrf.mxu0
        %v1531 = vadd.f32 0.0, %v1530
        %v1532 = vpop.f32.mrf.mxu0
        %v1533 = vpop.f32.mrf.mxu0
        %v1534 = vadd.f32 0.0, %v1533
        %v1535 = vpop.f32.mrf.mxu0
        %1536 = vmatprep.mubr.bf16.mxu0 0
        %1537 = vmatmul.mubr.bf16.gmra.mxu0 %v358
        %v1538 = vpop.f32.mrf.mxu0
        %v1539 = vadd.f32 0.0, %v1538
        %v1540 = vpop.f32.mrf.mxu0
        %v1541 = vpop.f32.mrf.mxu0
        %v1542 = vadd.f32 0.0, %v1541
        %v1543 = vpop.f32.mrf.mxu0
        %1544 = vmatprep.mubr.bf16.mxu0 0
        %1545 = vmatmul.mubr.bf16.gmra.mxu0 %v359
        %v1546 = vpop.f32.mrf.mxu0
        %v1547 = vadd.f32 0.0, %v1546
        %v1548 = vpop.f32.mrf.mxu0
        %v1549 = vpop.f32.mrf.mxu0
        %v1550 = vadd.f32 0.0, %v1549
        %v1551 = vpop.f32.mrf.mxu0
        %1552 = vmatprep.mubr.bf16.mxu0 0
        %1553 = vmatmul.mubr.bf16.gmra.mxu0 %v360
        %v1554 = vpop.f32.mrf.mxu0
        %v1555 = vadd.f32 0.0, %v1554
        %v1556 = vpop.f32.mrf.mxu0
        %v1557 = vpop.f32.mrf.mxu0
        %v1558 = vadd.f32 0.0, %v1557
        %v1559 = vpop.f32.mrf.mxu0
        %1560 = vmatprep.mubr.bf16.mxu0 0
        %1561 = vmatmul.mubr.bf16.gmra.mxu0 %v361
        %v1562 = vpop.f32.mrf.mxu0
        %v1563 = vadd.f32 0.0, %v1562
        %v1564 = vpop.f32.mrf.mxu0
        %v1565 = vpop.f32.mrf.mxu0
        %v1566 = vadd.f32 0.0, %v1565
        %v1567 = vpop.f32.mrf.mxu0
        %1568 = vmatprep.mubr.bf16.mxu0 0
        %1569 = vmatmul.mubr.bf16.gmra.mxu0 %v362
        %v1570 = vpop.f32.mrf.mxu0
        %v1571 = vadd.f32 0.0, %v1570
        %v1572 = vpop.f32.mrf.mxu0
        %v1573 = vpop.f32.mrf.mxu0
        %v1574 = vadd.f32 0.0, %v1573
        %v1575 = vpop.f32.mrf.mxu0
        %1576 = vmatprep.mubr.bf16.mxu0 0
        %1577 = vmatmul.mubr.bf16.gmra.mxu0 %v363
        %v1578 = vpop.f32.mrf.mxu0
        %v1579 = vadd.f32 0.0, %v1578
        %v1580 = vpop.f32.mrf.mxu0
        %v1581 = vpop.f32.mrf.mxu0
        %v1582 = vadd.f32 0.0, %v1581
        %v1583 = vpop.f32.mrf.mxu0
        %1584 = vmatprep.mubr.bf16.mxu0 0
        %1585 = vmatmul.mubr.bf16.gmra.mxu0 %v364
        %v1586 = vpop.f32.mrf.mxu0
        %v1587 = vadd.f32 0.0, %v1586
        %v1588 = vpop.f32.mrf.mxu0
        %v1589 = vpop.f32.mrf.mxu0
        %v1590 = vadd.f32 0.0, %v1589
        %v1591 = vpop.f32.mrf.mxu0
        %1592 = vdwg.mxu0
        %v1593 = vpack.c.bf16 %v1534, %v1531
        %v1594 = vpack.c.bf16 %v1542, %v1539
        %v1595 = vpack.c.bf16 %v1550, %v1547
        %v1596 = vpack.c.bf16 %v1558, %v1555
        %v1613 = vunpack.c.l.b16 %v1480
        %v1614 = vunpack.c.l.b16 %v1481
        %v1615 = vunpack.c.l.b16 %v1482
        %v1616 = vunpack.c.l.b16 %v1483
        %v1617 = vunpack.c.l.b16 %v1484
        %v1618 = vunpack.c.l.b16 %v1485
        %v1619 = vunpack.c.l.b16 %v1486
        %v1620 = vunpack.c.l.b16 %v1487
        %v1621 = vunpack.c.l.b16 %v1488
        %v1622 = vunpack.c.l.b16 %v1489
        %v1623 = vunpack.c.l.b16 %v1490
        %v1624 = vunpack.c.l.b16 %v1491
        %v1625 = vunpack.c.l.b16 %v1492
        %v1626 = vunpack.c.l.b16 %v1493
        %v1627 = vunpack.c.l.b16 %v1494
        %v1628 = vunpack.c.l.b16 %v1495
        %v1629 = vpack.c.b16 %v1614, %v1613
        %v1630 = vpack.c.b16 %v1616, %v1615
        %v1631 = vpack.c.b16 %v1618, %v1617
        %v1632 = vpack.c.b16 %v1620, %v1619
        %v1633 = vpack.c.b16 %v1622, %v1621
        %v1634 = vpack.c.b16 %v1624, %v1623
        %v1635 = vpack.c.b16 %v1626, %v1625
        %v1636 = vpack.c.b16 %v1628, %v1627
        %1645 = vmatprep.subr.bf16.mxu0 0
        %1646 = vmatpush1.bf16.msra.mxu0 %v1636
        %1647 = vmatprep.subr.bf16.mxu0 0
        %1648 = vmatpush1.bf16.msra.mxu0 %v1635
        %1649 = vmatprep.subr.bf16.mxu0 0
        %1650 = vmatpush1.bf16.msra.mxu0 %v1634
        %1651 = vmatprep.subr.bf16.mxu0 0
        %1652 = vmatpush1.bf16.msra.mxu0 %v1633
        %1653 = vmatprep.subr.bf16.mxu0 0
        %1654 = vmatpush1.bf16.msra.mxu0 %v1632
        %1655 = vmatprep.subr.bf16.mxu0 0
        %1656 = vmatpush1.bf16.msra.mxu0 %v1631
        %1657 = vmatprep.subr.bf16.mxu0 0
        %1658 = vmatpush1.bf16.msra.mxu0 %v1630
        %1659 = vmatprep.subr.bf16.mxu0 0
        %1660 = vmatpush1.bf16.msra.mxu0 %v1629
        %1661 = vmatprep.subr.bf16.mxu0 0
        %1662 = vmatpush2.bf16.msra.mxu0 0
        %1663 = vmatprep.subr.bf16.mxu0 0
        %1664 = vmatpush2.bf16.msra.mxu0 0
        %1665 = vmatprep.subr.bf16.mxu0 0
        %1666 = vmatpush2.bf16.msra.mxu0 0
        %1667 = vmatprep.subr.bf16.mxu0 0
        %1668 = vmatpush2.bf16.msra.mxu0 0
        %1669 = vmatprep.subr.bf16.mxu0 0
        %1670 = vmatpush2.bf16.msra.mxu0 0
        %1671 = vmatprep.subr.bf16.mxu0 0
        %1672 = vmatpush2.bf16.msra.mxu0 0
        %1673 = vmatprep.subr.bf16.mxu0 0
        %1674 = vmatpush2.bf16.msra.mxu0 0
        %1675 = vmatprep.subr.bf16.mxu0 0
        %1676 = vmatpush2.bf16.msra.mxu0 0
        %1677 = vmatprep.mubr.bf16.mxu0 0
        %1678 = vmatmul.mubr.bf16.gmra.mxu0 %v1593
        %v1679 = vpop.f32.mrf.mxu0
        %v1680 = vadd.f32 0.0, %v1679
        %v1681 = vpop.f32.mrf.mxu0
        %v1682 = vpop.f32.mrf.mxu0
        %v1683 = vadd.f32 0.0, %v1682
        %v1684 = vpop.f32.mrf.mxu0
        %1685 = vmatprep.mubr.bf16.mxu0 0
        %1686 = vmatmul.mubr.bf16.gmra.mxu0 %v1594
        %v1687 = vpop.f32.mrf.mxu0
        %v1688 = vadd.f32 0.0, %v1687
        %v1689 = vpop.f32.mrf.mxu0
        %v1690 = vpop.f32.mrf.mxu0
        %v1691 = vadd.f32 0.0, %v1690
        %v1692 = vpop.f32.mrf.mxu0
        %1693 = vmatprep.mubr.bf16.mxu0 0
        %1694 = vmatmul.mubr.bf16.gmra.mxu0 %v1595
        %v1695 = vpop.f32.mrf.mxu0
        %v1696 = vadd.f32 0.0, %v1695
        %v1697 = vpop.f32.mrf.mxu0
        %v1698 = vpop.f32.mrf.mxu0
        %v1699 = vadd.f32 0.0, %v1698
        %v1700 = vpop.f32.mrf.mxu0
        %1701 = vmatprep.mubr.bf16.mxu0 0
        %1702 = vmatmul.mubr.bf16.gmra.mxu0 %v1596
        %v1703 = vpop.f32.mrf.mxu0
        %v1704 = vadd.f32 0.0, %v1703
        %v1705 = vpop.f32.mrf.mxu0
        %v1706 = vpop.f32.mrf.mxu0
        %v1707 = vadd.f32 0.0, %v1706
        %v1708 = vpop.f32.mrf.mxu0
        %1709 = vdwg.mxu0
        %v1710 = vpack.c.bf16 %v1566, %v1563
        %v1711 = vpack.c.bf16 %v1574, %v1571
        %v1712 = vpack.c.bf16 %v1582, %v1579
        %v1713 = vpack.c.bf16 %v1590, %v1587
        %1714 = vmatprep.subr.bf16.mxu0 0
        %1715 = vmatpush1.bf16.msra.mxu0 %v1636
        %1716 = vmatprep.subr.bf16.mxu0 0
        %1717 = vmatpush1.bf16.msra.mxu0 %v1635
        %1718 = vmatprep.subr.bf16.mxu0 0
        %1719 = vmatpush1.bf16.msra.mxu0 %v1634
        %1720 = vmatprep.subr.bf16.mxu0 0
        %1721 = vmatpush1.bf16.msra.mxu0 %v1633
        %1722 = vmatprep.subr.bf16.mxu0 0
        %1723 = vmatpush1.bf16.msra.mxu0 %v1632
        %1724 = vmatprep.subr.bf16.mxu0 0
        %1725 = vmatpush1.bf16.msra.mxu0 %v1631
        %1726 = vmatprep.subr.bf16.mxu0 0
        %1727 = vmatpush1.bf16.msra.mxu0 %v1630
        %1728 = vmatprep.subr.bf16.mxu0 0
        %1729 = vmatpush1.bf16.msra.mxu0 %v1629
        %1730 = vmatprep.subr.bf16.mxu0 0
        %1731 = vmatpush2.bf16.msra.mxu0 0
        %1732 = vmatprep.subr.bf16.mxu0 0
        %1733 = vmatpush2.bf16.msra.mxu0 0
        %1734 = vmatprep.subr.bf16.mxu0 0
        %1735 = vmatpush2.bf16.msra.mxu0 0
        %1736 = vmatprep.subr.bf16.mxu0 0
        %1737 = vmatpush2.bf16.msra.mxu0 0
        %1738 = vmatprep.subr.bf16.mxu0 0
        %1739 = vmatpush2.bf16.msra.mxu0 0
        %1740 = vmatprep.subr.bf16.mxu0 0
        %1741 = vmatpush2.bf16.msra.mxu0 0
        %1742 = vmatprep.subr.bf16.mxu0 0
        %1743 = vmatpush2.bf16.msra.mxu0 0
        %1744 = vmatprep.subr.bf16.mxu0 0
        %1745 = vmatpush2.bf16.msra.mxu0 0
        %1746 = vmatprep.mubr.bf16.mxu0 0
        %1747 = vmatmul.mubr.bf16.gmra.mxu0 %v1710
        %v1748 = vpop.f32.mrf.mxu0
        %v1749 = vadd.f32 0.0, %v1748
        %v1750 = vpop.f32.mrf.mxu0
        %v1751 = vpop.f32.mrf.mxu0
        %v1752 = vadd.f32 0.0, %v1751
        %v1753 = vpop.f32.mrf.mxu0
        %1754 = vmatprep.mubr.bf16.mxu0 0
        %1755 = vmatmul.mubr.bf16.gmra.mxu0 %v1711
        %v1756 = vpop.f32.mrf.mxu0
        %v1757 = vadd.f32 0.0, %v1756
        %v1758 = vpop.f32.mrf.mxu0
        %v1759 = vpop.f32.mrf.mxu0
        %v1760 = vadd.f32 0.0, %v1759
        %v1761 = vpop.f32.mrf.mxu0
        %1762 = vmatprep.mubr.bf16.mxu0 0
        %1763 = vmatmul.mubr.bf16.gmra.mxu0 %v1712
        %v1764 = vpop.f32.mrf.mxu0
        %v1765 = vadd.f32 0.0, %v1764
        %v1766 = vpop.f32.mrf.mxu0
        %v1767 = vpop.f32.mrf.mxu0
        %v1768 = vadd.f32 0.0, %v1767
        %v1769 = vpop.f32.mrf.mxu0
        %1770 = vmatprep.mubr.bf16.mxu0 0
        %1771 = vmatmul.mubr.bf16.gmra.mxu0 %v1713
        %v1772 = vpop.f32.mrf.mxu0
        %v1773 = vadd.f32 0.0, %v1772
        %v1774 = vpop.f32.mrf.mxu0
        %v1775 = vpop.f32.mrf.mxu0
        %v1776 = vadd.f32 0.0, %v1775
        %v1777 = vpop.f32.mrf.mxu0
        %1778 = vdwg.mxu0
        %v1779 = vld [vmem:[#allocation5 + $0x11] ss:$0 sm:$0xff]
        %v1780 = vadd.f32 %v1680, %v1779
        %v1781 = vadd.f32 %v1683, %v1779
        %v1782 = vadd.f32 %v1688, %v1779
        %v1783 = vadd.f32 %v1691, %v1779
        %v1784 = vadd.f32 %v1696, %v1779
        %v1785 = vadd.f32 %v1699, %v1779
        %v1786 = vadd.f32 %v1704, %v1779
        %v1787 = vadd.f32 %v1707, %v1779
        %v1788 = vadd.f32 %v1749, %v1779
        %v1789 = vadd.f32 %v1752, %v1779
        %v1790 = vadd.f32 %v1757, %v1779
        %v1791 = vadd.f32 %v1760, %v1779
        %v1792 = vadd.f32 %v1765, %v1779
        %v1793 = vadd.f32 %v1768, %v1779
        %v1794 = vadd.f32 %v1773, %v1779
        %v1795 = vadd.f32 %v1776, %v1779
        %v1796 = vmax.f32 %v1780, 0.0
        %v1797 = vmax.f32 %v1781, 0.0
        %v1798 = vmax.f32 %v1782, 0.0
        %v1799 = vmax.f32 %v1783, 0.0
        %v1800 = vmax.f32 %v1784, 0.0
        %v1801 = vmax.f32 %v1785, 0.0
        %v1802 = vmax.f32 %v1786, 0.0
        %v1803 = vmax.f32 %v1787, 0.0
        %v1804 = vmax.f32 %v1788, 0.0
        %v1805 = vmax.f32 %v1789, 0.0
        %v1806 = vmax.f32 %v1790, 0.0
        %v1807 = vmax.f32 %v1791, 0.0
        %v1808 = vmax.f32 %v1792, 0.0
        %v1809 = vmax.f32 %v1793, 0.0
        %v1810 = vmax.f32 %v1794, 0.0
        %v1811 = vmax.f32 %v1795, 0.0
        %v1812 = vpack.c.bf16 %v1797, %v1796
        %v1813 = vpack.c.bf16 %v1799, %v1798
        %v1814 = vpack.c.bf16 %v1801, %v1800
        %v1815 = vpack.c.bf16 %v1803, %v1802
        %v1816 = vpack.c.bf16 %v1805, %v1804
        %v1817 = vpack.c.bf16 %v1807, %v1806
        %v1818 = vpack.c.bf16 %v1809, %v1808
        %v1819 = vpack.c.bf16 %v1811, %v1810
        %v1820 = vld [vmem:[#allocation2 + $0xf0] sm:$0xff]
        %v1821 = vld [vmem:[#allocation2 + $0xf8] sm:$0xff]
        %v1822 = vld [vmem:[#allocation2 + $0x100] sm:$0xff]
        %v1823 = vld [vmem:[#allocation2 + $0x108] sm:$0xff]
        %v1824 = vld [vmem:[#allocation2 + $0x110] sm:$0xff]
        %v1825 = vld [vmem:[#allocation2 + $0x118] sm:$0xff]
        %v1826 = vld [vmem:[#allocation2 + $0x120] sm:$0xff]
        %v1827 = vld [vmem:[#allocation2 + $0x128] sm:$0xff]
        %v1828 = vld [vmem:[#allocation2 + $0x130] sm:$0xff]
        %v1829 = vld [vmem:[#allocation2 + $0x138] sm:$0xff]
        %v1830 = vld [vmem:[#allocation2 + $0x140] sm:$0xff]
        %v1831 = vld [vmem:[#allocation2 + $0x148] sm:$0xff]
        %v1832 = vld [vmem:[#allocation2 + $0x150] sm:$0xff]
        %v1833 = vld [vmem:[#allocation2 + $0x158] sm:$0xff]
        %v1834 = vld [vmem:[#allocation2 + $0x160] sm:$0xff]
        %v1835 = vld [vmem:[#allocation2 + $0x168] sm:$0xff]
        %1836 = vmatprep.subr.bf16.mxu0 0
        %1837 = vmatpush1.bf16.msra.mxu0 %v1819
        %1838 = vmatprep.subr.bf16.mxu0 0
        %1839 = vmatpush1.bf16.msra.mxu0 %v1818
        %1840 = vmatprep.subr.bf16.mxu0 0
        %1841 = vmatpush1.bf16.msra.mxu0 %v1817
        %1842 = vmatprep.subr.bf16.mxu0 0
        %1843 = vmatpush1.bf16.msra.mxu0 %v1816
        %1844 = vmatprep.subr.bf16.mxu0 0
        %1845 = vmatpush1.bf16.msra.mxu0 %v1815
        %1846 = vmatprep.subr.bf16.mxu0 0
        %1847 = vmatpush1.bf16.msra.mxu0 %v1814
        %1848 = vmatprep.subr.bf16.mxu0 0
        %1849 = vmatpush1.bf16.msra.mxu0 %v1813
        %1850 = vmatprep.subr.bf16.mxu0 0
        %1851 = vmatpush1.bf16.msra.mxu0 %v1812
        %1852 = vmatprep.subr.bf16.mxu0 0
        %1853 = vmatpush2.bf16.msra.mxu0 0
        %1854 = vmatprep.subr.bf16.mxu0 0
        %1855 = vmatpush2.bf16.msra.mxu0 0
        %1856 = vmatprep.subr.bf16.mxu0 0
        %1857 = vmatpush2.bf16.msra.mxu0 0
        %1858 = vmatprep.subr.bf16.mxu0 0
        %1859 = vmatpush2.bf16.msra.mxu0 0
        %1860 = vmatprep.subr.bf16.mxu0 0
        %1861 = vmatpush2.bf16.msra.mxu0 0
        %1862 = vmatprep.subr.bf16.mxu0 0
        %1863 = vmatpush2.bf16.msra.mxu0 0
        %1864 = vmatprep.subr.bf16.mxu0 0
        %1865 = vmatpush2.bf16.msra.mxu0 0
        %1866 = vmatprep.subr.bf16.mxu0 0
        %1867 = vmatpush2.bf16.msra.mxu0 0
        %1868 = vmatprep.mubr.bf16.mxu0 0
        %1869 = vmatmul.mubr.bf16.gmra.mxu0 %v357
        %v1870 = vpop.f32.mrf.mxu0
        %v1871 = vadd.f32 0.0, %v1870
        %v1872 = vpop.f32.mrf.mxu0
        %v1873 = vpop.f32.mrf.mxu0
        %v1874 = vadd.f32 0.0, %v1873
        %v1875 = vpop.f32.mrf.mxu0
        %1876 = vmatprep.mubr.bf16.mxu0 0
        %1877 = vmatmul.mubr.bf16.gmra.mxu0 %v358
        %v1878 = vpop.f32.mrf.mxu0
        %v1879 = vadd.f32 0.0, %v1878
        %v1880 = vpop.f32.mrf.mxu0
        %v1881 = vpop.f32.mrf.mxu0
        %v1882 = vadd.f32 0.0, %v1881
        %v1883 = vpop.f32.mrf.mxu0
        %1884 = vmatprep.mubr.bf16.mxu0 0
        %1885 = vmatmul.mubr.bf16.gmra.mxu0 %v359
        %v1886 = vpop.f32.mrf.mxu0
        %v1887 = vadd.f32 0.0, %v1886
        %v1888 = vpop.f32.mrf.mxu0
        %v1889 = vpop.f32.mrf.mxu0
        %v1890 = vadd.f32 0.0, %v1889
        %v1891 = vpop.f32.mrf.mxu0
        %1892 = vmatprep.mubr.bf16.mxu0 0
        %1893 = vmatmul.mubr.bf16.gmra.mxu0 %v360
        %v1894 = vpop.f32.mrf.mxu0
        %v1895 = vadd.f32 0.0, %v1894
        %v1896 = vpop.f32.mrf.mxu0
        %v1897 = vpop.f32.mrf.mxu0
        %v1898 = vadd.f32 0.0, %v1897
        %v1899 = vpop.f32.mrf.mxu0
        %1900 = vmatprep.mubr.bf16.mxu0 0
        %1901 = vmatmul.mubr.bf16.gmra.mxu0 %v361
        %v1902 = vpop.f32.mrf.mxu0
        %v1903 = vadd.f32 0.0, %v1902
        %v1904 = vpop.f32.mrf.mxu0
        %v1905 = vpop.f32.mrf.mxu0
        %v1906 = vadd.f32 0.0, %v1905
        %v1907 = vpop.f32.mrf.mxu0
        %1908 = vmatprep.mubr.bf16.mxu0 0
        %1909 = vmatmul.mubr.bf16.gmra.mxu0 %v362
        %v1910 = vpop.f32.mrf.mxu0
        %v1911 = vadd.f32 0.0, %v1910
        %v1912 = vpop.f32.mrf.mxu0
        %v1913 = vpop.f32.mrf.mxu0
        %v1914 = vadd.f32 0.0, %v1913
        %v1915 = vpop.f32.mrf.mxu0
        %1916 = vmatprep.mubr.bf16.mxu0 0
        %1917 = vmatmul.mubr.bf16.gmra.mxu0 %v363
        %v1918 = vpop.f32.mrf.mxu0
        %v1919 = vadd.f32 0.0, %v1918
        %v1920 = vpop.f32.mrf.mxu0
        %v1921 = vpop.f32.mrf.mxu0
        %v1922 = vadd.f32 0.0, %v1921
        %v1923 = vpop.f32.mrf.mxu0
        %1924 = vmatprep.mubr.bf16.mxu0 0
        %1925 = vmatmul.mubr.bf16.gmra.mxu0 %v364
        %v1926 = vpop.f32.mrf.mxu0
        %v1927 = vadd.f32 0.0, %v1926
        %v1928 = vpop.f32.mrf.mxu0
        %v1929 = vpop.f32.mrf.mxu0
        %v1930 = vadd.f32 0.0, %v1929
        %v1931 = vpop.f32.mrf.mxu0
        %1932 = vdwg.mxu0
        %v1933 = vpack.c.bf16 %v1874, %v1871
        %v1934 = vpack.c.bf16 %v1882, %v1879
        %v1935 = vpack.c.bf16 %v1890, %v1887
        %v1936 = vpack.c.bf16 %v1898, %v1895
        %v1953 = vunpack.c.l.b16 %v1820
        %v1954 = vunpack.c.h.b16 %v1820
        %v1955 = vunpack.c.l.b16 %v1821
        %v1956 = vunpack.c.h.b16 %v1821
        %v1957 = vunpack.c.l.b16 %v1822
        %v1958 = vunpack.c.h.b16 %v1822
        %v1959 = vunpack.c.l.b16 %v1823
        %v1960 = vunpack.c.h.b16 %v1823
        %v1961 = vunpack.c.l.b16 %v1824
        %v1962 = vunpack.c.h.b16 %v1824
        %v1963 = vunpack.c.l.b16 %v1825
        %v1964 = vunpack.c.h.b16 %v1825
        %v1965 = vunpack.c.l.b16 %v1826
        %v1966 = vunpack.c.h.b16 %v1826
        %v1967 = vunpack.c.l.b16 %v1827
        %v1968 = vunpack.c.h.b16 %v1827
        %v1969 = vunpack.c.l.b16 %v1828
        %v1970 = vunpack.c.h.b16 %v1828
        %v1971 = vunpack.c.l.b16 %v1829
        %v1972 = vunpack.c.h.b16 %v1829
        %v1973 = vunpack.c.l.b16 %v1830
        %v1974 = vunpack.c.h.b16 %v1830
        %v1975 = vunpack.c.l.b16 %v1831
        %v1976 = vunpack.c.h.b16 %v1831
        %v1977 = vunpack.c.l.b16 %v1832
        %v1978 = vunpack.c.h.b16 %v1832
        %v1979 = vunpack.c.l.b16 %v1833
        %v1980 = vunpack.c.h.b16 %v1833
        %v1981 = vunpack.c.l.b16 %v1834
        %v1982 = vunpack.c.h.b16 %v1834
        %v1983 = vunpack.c.l.b16 %v1835
        %v1984 = vunpack.c.h.b16 %v1835
        %v1985 = vpack.c.b16 %v1955, %v1953
        %v1986 = vpack.c.b16 %v1956, %v1954
        %v1987 = vpack.c.b16 %v1959, %v1957
        %v1988 = vpack.c.b16 %v1960, %v1958
        %v1989 = vpack.c.b16 %v1963, %v1961
        %v1990 = vpack.c.b16 %v1964, %v1962
        %v1991 = vpack.c.b16 %v1967, %v1965
        %v1992 = vpack.c.b16 %v1968, %v1966
        %v1993 = vpack.c.b16 %v1971, %v1969
        %v1994 = vpack.c.b16 %v1972, %v1970
        %v1995 = vpack.c.b16 %v1975, %v1973
        %v1996 = vpack.c.b16 %v1976, %v1974
        %v1997 = vpack.c.b16 %v1979, %v1977
        %v1998 = vpack.c.b16 %v1980, %v1978
        %v1999 = vpack.c.b16 %v1983, %v1981
        %v2000 = vpack.c.b16 %v1984, %v1982
        %2017 = vmatprep.subr.bf16.mxu0 %v2000
        %2018 = vmatpush1.bf16.msra.mxu0 %v1999
        %2019 = vmatprep.subr.bf16.mxu0 %v1998
        %2020 = vmatpush1.bf16.msra.mxu0 %v1997
        %2021 = vmatprep.subr.bf16.mxu0 %v1996
        %2022 = vmatpush1.bf16.msra.mxu0 %v1995
        %2023 = vmatprep.subr.bf16.mxu0 %v1994
        %2024 = vmatpush1.bf16.msra.mxu0 %v1993
        %2025 = vmatprep.subr.bf16.mxu0 %v1992
        %2026 = vmatpush1.bf16.msra.mxu0 %v1991
        %2027 = vmatprep.subr.bf16.mxu0 %v1990
        %2028 = vmatpush1.bf16.msra.mxu0 %v1989
        %2029 = vmatprep.subr.bf16.mxu0 %v1988
        %2030 = vmatpush1.bf16.msra.mxu0 %v1987
        %2031 = vmatprep.subr.bf16.mxu0 %v1986
        %2032 = vmatpush1.bf16.msra.mxu0 %v1985
        %2033 = vmatprep.subr.bf16.mxu0 0
        %2034 = vmatpush2.bf16.msra.mxu0 0
        %2035 = vmatprep.subr.bf16.mxu0 0
        %2036 = vmatpush2.bf16.msra.mxu0 0
        %2037 = vmatprep.subr.bf16.mxu0 0
        %2038 = vmatpush2.bf16.msra.mxu0 0
        %2039 = vmatprep.subr.bf16.mxu0 0
        %2040 = vmatpush2.bf16.msra.mxu0 0
        %2041 = vmatprep.subr.bf16.mxu0 0
        %2042 = vmatpush2.bf16.msra.mxu0 0
        %2043 = vmatprep.subr.bf16.mxu0 0
        %2044 = vmatpush2.bf16.msra.mxu0 0
        %2045 = vmatprep.subr.bf16.mxu0 0
        %2046 = vmatpush2.bf16.msra.mxu0 0
        %2047 = vmatprep.subr.bf16.mxu0 0
        %2048 = vmatpush2.bf16.msra.mxu0 0
        %2049 = vmatprep.mubr.bf16.mxu0 0
        %2050 = vmatmul.mubr.bf16.gmra.mxu0 %v1933
        %v2051 = vpop.f32.mrf.mxu0
        %v2052 = vadd.f32 0.0, %v2051
        %v2053 = vpop.f32.mrf.mxu0
        %v2054 = vadd.f32 0.0, %v2053
        %v2055 = vpop.f32.mrf.mxu0
        %v2056 = vadd.f32 0.0, %v2055
        %v2057 = vpop.f32.mrf.mxu0
        %v2058 = vadd.f32 0.0, %v2057
        %2059 = vmatprep.mubr.bf16.mxu0 0
        %2060 = vmatmul.mubr.bf16.gmra.mxu0 %v1934
        %v2061 = vpop.f32.mrf.mxu0
        %v2062 = vadd.f32 0.0, %v2061
        %v2063 = vpop.f32.mrf.mxu0
        %v2064 = vadd.f32 0.0, %v2063
        %v2065 = vpop.f32.mrf.mxu0
        %v2066 = vadd.f32 0.0, %v2065
        %v2067 = vpop.f32.mrf.mxu0
        %v2068 = vadd.f32 0.0, %v2067
        %2069 = vmatprep.mubr.bf16.mxu0 0
        %2070 = vmatmul.mubr.bf16.gmra.mxu0 %v1935
        %v2071 = vpop.f32.mrf.mxu0
        %v2072 = vadd.f32 0.0, %v2071
        %v2073 = vpop.f32.mrf.mxu0
        %v2074 = vadd.f32 0.0, %v2073
        %v2075 = vpop.f32.mrf.mxu0
        %v2076 = vadd.f32 0.0, %v2075
        %v2077 = vpop.f32.mrf.mxu0
        %v2078 = vadd.f32 0.0, %v2077
        %2079 = vmatprep.mubr.bf16.mxu0 0
        %2080 = vmatmul.mubr.bf16.gmra.mxu0 %v1936
        %v2081 = vpop.f32.mrf.mxu0
        %v2082 = vadd.f32 0.0, %v2081
        %v2083 = vpop.f32.mrf.mxu0
        %v2084 = vadd.f32 0.0, %v2083
        %v2085 = vpop.f32.mrf.mxu0
        %v2086 = vadd.f32 0.0, %v2085
        %v2087 = vpop.f32.mrf.mxu0
        %v2088 = vadd.f32 0.0, %v2087
        %2089 = vdwg.mxu0
        %v2090 = vpack.c.bf16 %v1906, %v1903
        %v2091 = vpack.c.bf16 %v1914, %v1911
        %v2092 = vpack.c.bf16 %v1922, %v1919
        %v2093 = vpack.c.bf16 %v1930, %v1927
        %2094 = vmatprep.subr.bf16.mxu0 %v2000
        %2095 = vmatpush1.bf16.msra.mxu0 %v1999
        %2096 = vmatprep.subr.bf16.mxu0 %v1998
        %2097 = vmatpush1.bf16.msra.mxu0 %v1997
        %2098 = vmatprep.subr.bf16.mxu0 %v1996
        %2099 = vmatpush1.bf16.msra.mxu0 %v1995
        %2100 = vmatprep.subr.bf16.mxu0 %v1994
        %2101 = vmatpush1.bf16.msra.mxu0 %v1993
        %2102 = vmatprep.subr.bf16.mxu0 %v1992
        %2103 = vmatpush1.bf16.msra.mxu0 %v1991
        %2104 = vmatprep.subr.bf16.mxu0 %v1990
        %2105 = vmatpush1.bf16.msra.mxu0 %v1989
        %2106 = vmatprep.subr.bf16.mxu0 %v1988
        %2107 = vmatpush1.bf16.msra.mxu0 %v1987
        %2108 = vmatprep.subr.bf16.mxu0 %v1986
        %2109 = vmatpush1.bf16.msra.mxu0 %v1985
        %2110 = vmatprep.subr.bf16.mxu0 0
        %2111 = vmatpush2.bf16.msra.mxu0 0
        %2112 = vmatprep.subr.bf16.mxu0 0
        %2113 = vmatpush2.bf16.msra.mxu0 0
        %2114 = vmatprep.subr.bf16.mxu0 0
        %2115 = vmatpush2.bf16.msra.mxu0 0
        %2116 = vmatprep.subr.bf16.mxu0 0
        %2117 = vmatpush2.bf16.msra.mxu0 0
        %2118 = vmatprep.subr.bf16.mxu0 0
        %2119 = vmatpush2.bf16.msra.mxu0 0
        %2120 = vmatprep.subr.bf16.mxu0 0
        %2121 = vmatpush2.bf16.msra.mxu0 0
        %2122 = vmatprep.subr.bf16.mxu0 0
        %2123 = vmatpush2.bf16.msra.mxu0 0
        %2124 = vmatprep.subr.bf16.mxu0 0
        %2125 = vmatpush2.bf16.msra.mxu0 0
        %2126 = vmatprep.mubr.bf16.mxu0 0
        %2127 = vmatmul.mubr.bf16.gmra.mxu0 %v2090
        %v2128 = vpop.f32.mrf.mxu0
        %v2129 = vadd.f32 0.0, %v2128
        %v2130 = vpop.f32.mrf.mxu0
        %v2131 = vadd.f32 0.0, %v2130
        %v2132 = vpop.f32.mrf.mxu0
        %v2133 = vadd.f32 0.0, %v2132
        %v2134 = vpop.f32.mrf.mxu0
        %v2135 = vadd.f32 0.0, %v2134
        %2136 = vmatprep.mubr.bf16.mxu0 0
        %2137 = vmatmul.mubr.bf16.gmra.mxu0 %v2091
        %v2138 = vpop.f32.mrf.mxu0
        %v2139 = vadd.f32 0.0, %v2138
        %v2140 = vpop.f32.mrf.mxu0
        %v2141 = vadd.f32 0.0, %v2140
        %v2142 = vpop.f32.mrf.mxu0
        %v2143 = vadd.f32 0.0, %v2142
        %v2144 = vpop.f32.mrf.mxu0
        %v2145 = vadd.f32 0.0, %v2144
        %2146 = vmatprep.mubr.bf16.mxu0 0
        %2147 = vmatmul.mubr.bf16.gmra.mxu0 %v2092
        %v2148 = vpop.f32.mrf.mxu0
        %v2149 = vadd.f32 0.0, %v2148
        %v2150 = vpop.f32.mrf.mxu0
        %v2151 = vadd.f32 0.0, %v2150
        %v2152 = vpop.f32.mrf.mxu0
        %v2153 = vadd.f32 0.0, %v2152
        %v2154 = vpop.f32.mrf.mxu0
        %v2155 = vadd.f32 0.0, %v2154
        %2156 = vmatprep.mubr.bf16.mxu0 0
        %2157 = vmatmul.mubr.bf16.gmra.mxu0 %v2093
        %v2158 = vpop.f32.mrf.mxu0
        %v2159 = vadd.f32 0.0, %v2158
        %v2160 = vpop.f32.mrf.mxu0
        %v2161 = vadd.f32 0.0, %v2160
        %v2162 = vpop.f32.mrf.mxu0
        %v2163 = vadd.f32 0.0, %v2162
        %v2164 = vpop.f32.mrf.mxu0
        %v2165 = vadd.f32 0.0, %v2164
        %2166 = vdwg.mxu0
        %s2167 = scalar_lea.vmem [#allocation5], 18
        %v2168 = vld [vmem:[%s2167] ss:$8 sm:$0x3]
        %v2170 = vlaneseq
        %v2171 = vshrl.u32 %v2170, 7
        %v2172 = vsub.s32 0, %v2171
        %v2173 = vrot.slane %v2168, %v2172
        %v2174 = vlaneseq
        %v2175 = vshrl.u32 %v2174, 7
        %v2176 = vsub.s32 1, %v2175
        %v2177 = vrot.slane %v2168, %v2176
        %v2180 = vadd.f32 %v2052, %v2173
        %v2181 = vadd.f32 %v2054, %v2177
        %v2182 = vadd.f32 %v2056, %v2173
        %v2183 = vadd.f32 %v2058, %v2177
        %v2184 = vadd.f32 %v2062, %v2173
        %v2185 = vadd.f32 %v2064, %v2177
        %v2186 = vadd.f32 %v2066, %v2173
        %v2187 = vadd.f32 %v2068, %v2177
        %v2188 = vadd.f32 %v2072, %v2173
        %v2189 = vadd.f32 %v2074, %v2177
        %v2190 = vadd.f32 %v2076, %v2173
        %v2191 = vadd.f32 %v2078, %v2177
        %v2192 = vadd.f32 %v2082, %v2173
        %v2193 = vadd.f32 %v2084, %v2177
        %v2194 = vadd.f32 %v2086, %v2173
        %v2195 = vadd.f32 %v2088, %v2177
        %v2196 = vadd.f32 %v2129, %v2173
        %v2197 = vadd.f32 %v2131, %v2177
        %v2198 = vadd.f32 %v2133, %v2173
        %v2199 = vadd.f32 %v2135, %v2177
        %v2200 = vadd.f32 %v2139, %v2173
        %v2201 = vadd.f32 %v2141, %v2177
        %v2202 = vadd.f32 %v2143, %v2173
        %v2203 = vadd.f32 %v2145, %v2177
        %v2204 = vadd.f32 %v2149, %v2173
        %v2205 = vadd.f32 %v2151, %v2177
        %v2206 = vadd.f32 %v2153, %v2173
        %v2207 = vadd.f32 %v2155, %v2177
        %v2208 = vadd.f32 %v2159, %v2173
        %v2209 = vadd.f32 %v2161, %v2177
        %v2210 = vadd.f32 %v2163, %v2173
        %v2211 = vadd.f32 %v2165, %v2177
        %v2212 = vpack.c.bf16 %v2182, %v2180
        %v2213 = vpack.c.bf16 %v2183, %v2181
        %v2214 = vpack.c.bf16 %v2186, %v2184
        %v2215 = vpack.c.bf16 %v2187, %v2185
        %v2216 = vpack.c.bf16 %v2190, %v2188
        %v2217 = vpack.c.bf16 %v2191, %v2189
        %v2218 = vpack.c.bf16 %v2194, %v2192
        %v2219 = vpack.c.bf16 %v2195, %v2193
        %v2220 = vpack.c.bf16 %v2198, %v2196
        %v2221 = vpack.c.bf16 %v2199, %v2197
        %v2222 = vpack.c.bf16 %v2202, %v2200
        %v2223 = vpack.c.bf16 %v2203, %v2201
        %v2224 = vpack.c.bf16 %v2206, %v2204
        %v2225 = vpack.c.bf16 %v2207, %v2205
        %v2226 = vpack.c.bf16 %v2210, %v2208
        %v2227 = vpack.c.bf16 %v2211, %v2209
        %v2228 = vld [vmem:[%s289] sm:$0xf]
        %2229 = vmatprep.subr.bf16.mxu0 %v2227
        %2230 = vmatpush1.bf16.msra.mxu0 %v2226
        %2231 = vmatprep.subr.bf16.mxu0 %v2225
        %2232 = vmatpush1.bf16.msra.mxu0 %v2224
        %2233 = vmatprep.subr.bf16.mxu0 %v2223
        %2234 = vmatpush1.bf16.msra.mxu0 %v2222
        %2235 = vmatprep.subr.bf16.mxu0 %v2221
        %2236 = vmatpush1.bf16.msra.mxu0 %v2220
        %2237 = vmatprep.subr.bf16.mxu0 %v2219
        %2238 = vmatpush1.bf16.msra.mxu0 %v2218
        %2239 = vmatprep.subr.bf16.mxu0 %v2217
        %2240 = vmatpush1.bf16.msra.mxu0 %v2216
        %2241 = vmatprep.subr.bf16.mxu0 %v2215
        %2242 = vmatpush1.bf16.msra.mxu0 %v2214
        %2243 = vmatprep.subr.bf16.mxu0 %v2213
        %2244 = vmatpush1.bf16.msra.mxu0 %v2212
        %2245 = vmatprep.subr.bf16.mxu0 0
        %2246 = vmatpush2.bf16.msra.mxu0 0
        %2247 = vmatprep.subr.bf16.mxu0 0
        %2248 = vmatpush2.bf16.msra.mxu0 0
        %2249 = vmatprep.subr.bf16.mxu0 0
        %2250 = vmatpush2.bf16.msra.mxu0 0
        %2251 = vmatprep.subr.bf16.mxu0 0
        %2252 = vmatpush2.bf16.msra.mxu0 0
        %2253 = vmatprep.subr.bf16.mxu0 0
        %2254 = vmatpush2.bf16.msra.mxu0 0
        %2255 = vmatprep.subr.bf16.mxu0 0
        %2256 = vmatpush2.bf16.msra.mxu0 0
        %2257 = vmatprep.subr.bf16.mxu0 0
        %2258 = vmatpush2.bf16.msra.mxu0 0
        %2259 = vmatprep.subr.bf16.mxu0 0
        %2260 = vmatpush2.bf16.msra.mxu0 0
        %2261 = vmatprep.mubr.bf16.mxu0 0
        %2262 = vmatmul.mubr.bf16.gmra.mxu0 %v2228
        %v2263 = vpop.f32.mrf.mxu0
        %v2264 = vadd.f32 0.0, %v2263
        %v2265 = vpop.f32.mrf.mxu0
        %v2266 = vadd.f32 0.0, %v2265
        %v2267 = vpop.f32.mrf.mxu0
        %v2268 = vpop.f32.mrf.mxu0
        %2269 = vdwg.mxu0
        %v2270 = vmax.f32 %v2264, 0.0
        %v2271 = vmax.f32 %v2266, 0.0
        %v2272 = vld [vmem:[#allocation2 + $0x170] sm:$0xf]
        %v2273 = vld [vmem:[#allocation2 + $0x178] sm:$0xf]
        %v2274 = vld [vmem:[#allocation2 + $0x180] sm:$0xf]
        %v2275 = vld [vmem:[#allocation2 + $0x188] sm:$0xf]
        %v2276 = vld [vmem:[#allocation2 + $0x190] sm:$0xf]
        %v2277 = vld [vmem:[#allocation2 + $0x198] sm:$0xf]
        %v2278 = vld [vmem:[#allocation2 + $0x1a0] sm:$0xf]
        %v2279 = vld [vmem:[#allocation2 + $0x1a8] sm:$0xf]
        %v2280 = vld [vmem:[#allocation2 + $0x1b0] sm:$0xf]
        %v2281 = vld [vmem:[#allocation2 + $0x1b8] sm:$0xf]
        %v2282 = vld [vmem:[#allocation2 + $0x1c0] sm:$0xf]
        %v2283 = vld [vmem:[#allocation2 + $0x1c8] sm:$0xf]
        %v2284 = vld [vmem:[#allocation2 + $0x1d0] sm:$0xf]
        %v2285 = vld [vmem:[#allocation2 + $0x1d8] sm:$0xf]
        %v2286 = vld [vmem:[#allocation2 + $0x1e0] sm:$0xf]
        %v2287 = vld [vmem:[#allocation2 + $0x1e8] sm:$0xf]
        %v2288 = vld [vmem:[#allocation2 + $0x1f0] sm:$0xf]
        %v2289 = vld [vmem:[#allocation2 + $0x1f8] sm:$0xf]
        %v2290 = vld [vmem:[#allocation2 + $0x200] sm:$0xf]
        %v2291 = vld [vmem:[#allocation2 + $0x208] sm:$0xf]
        %v2292 = vld [vmem:[#allocation2 + $0x210] sm:$0xf]
        %v2293 = vld [vmem:[#allocation2 + $0x218] sm:$0xf]
        %v2294 = vld [vmem:[#allocation2 + $0x220] sm:$0xf]
        %v2295 = vld [vmem:[#allocation2 + $0x228] sm:$0xf]
        %v2296 = vld [vmem:[#allocation2 + $0x230] sm:$0xf]
        %v2297 = vld [vmem:[#allocation2 + $0x238] sm:$0xf]
        %v2298 = vld [vmem:[#allocation2 + $0x240] sm:$0xf]
        %v2299 = vld [vmem:[#allocation2 + $0x248] sm:$0xf]
        %v2300 = vld [vmem:[#allocation2 + $0x250] sm:$0xf]
        %v2301 = vld [vmem:[#allocation2 + $0x258] sm:$0xf]
        %v2302 = vld [vmem:[#allocation2 + $0x260] sm:$0xf]
        %v2303 = vld [vmem:[#allocation2 + $0x268] sm:$0xf]
        %v2304 = vpack.c.bf16 %v2270, %v2270
        %v2305 = vpack.c.bf16 %v2271, %v2271
        %v2306 = vld [vmem:[#allocation5 + $0x13] ss:$0 sm:$0xff]
        %v2339 = vunpack.c.l.b16 %v2272
        %v2340 = vunpack.c.l.b16 %v2273
        %v2341 = vunpack.c.l.b16 %v2274
        %v2342 = vunpack.c.l.b16 %v2275
        %v2343 = vunpack.c.l.b16 %v2276
        %v2344 = vunpack.c.l.b16 %v2277
        %v2345 = vunpack.c.l.b16 %v2278
        %v2346 = vunpack.c.l.b16 %v2279
        %v2347 = vunpack.c.l.b16 %v2280
        %v2348 = vunpack.c.l.b16 %v2281
        %v2349 = vunpack.c.l.b16 %v2282
        %v2350 = vunpack.c.l.b16 %v2283
        %v2351 = vunpack.c.l.b16 %v2284
        %v2352 = vunpack.c.l.b16 %v2285
        %v2353 = vunpack.c.l.b16 %v2286
        %v2354 = vunpack.c.l.b16 %v2287
        %v2355 = vunpack.c.l.b16 %v2288
        %v2356 = vunpack.c.l.b16 %v2289
        %v2357 = vunpack.c.l.b16 %v2290
        %v2358 = vunpack.c.l.b16 %v2291
        %v2359 = vunpack.c.l.b16 %v2292
        %v2360 = vunpack.c.l.b16 %v2293
        %v2361 = vunpack.c.l.b16 %v2294
        %v2362 = vunpack.c.l.b16 %v2295
        %v2363 = vunpack.c.l.b16 %v2296
        %v2364 = vunpack.c.l.b16 %v2297
        %v2365 = vunpack.c.l.b16 %v2298
        %v2366 = vunpack.c.l.b16 %v2299
        %v2367 = vunpack.c.l.b16 %v2300
        %v2368 = vunpack.c.l.b16 %v2301
        %v2369 = vunpack.c.l.b16 %v2302
        %v2370 = vunpack.c.l.b16 %v2303
        %v2371 = vpack.c.b16 %v2340, %v2339
        %v2372 = vpack.c.b16 %v2342, %v2341
        %v2373 = vpack.c.b16 %v2344, %v2343
        %v2374 = vpack.c.b16 %v2346, %v2345
        %v2375 = vpack.c.b16 %v2348, %v2347
        %v2376 = vpack.c.b16 %v2350, %v2349
        %v2377 = vpack.c.b16 %v2352, %v2351
        %v2378 = vpack.c.b16 %v2354, %v2353
        %v2379 = vpack.c.b16 %v2356, %v2355
        %v2380 = vpack.c.b16 %v2358, %v2357
        %v2381 = vpack.c.b16 %v2360, %v2359
        %v2382 = vpack.c.b16 %v2362, %v2361
        %v2383 = vpack.c.b16 %v2364, %v2363
        %v2384 = vpack.c.b16 %v2366, %v2365
        %v2385 = vpack.c.b16 %v2368, %v2367
        %v2386 = vpack.c.b16 %v2370, %v2369
        %2403 = vmatprep.subr.bf16.mxu0 0
        %2404 = vmatpush1.bf16.msra.mxu0 %v2378
        %2405 = vmatprep.subr.bf16.mxu0 0
        %2406 = vmatpush1.bf16.msra.mxu0 %v2377
        %2407 = vmatprep.subr.bf16.mxu0 0
        %2408 = vmatpush1.bf16.msra.mxu0 %v2376
        %2409 = vmatprep.subr.bf16.mxu0 0
        %2410 = vmatpush1.bf16.msra.mxu0 %v2375
        %2411 = vmatprep.subr.bf16.mxu0 0
        %2412 = vmatpush1.bf16.msra.mxu0 %v2374
        %2413 = vmatprep.subr.bf16.mxu0 0
        %2414 = vmatpush1.bf16.msra.mxu0 %v2373
        %2415 = vmatprep.subr.bf16.mxu0 0
        %2416 = vmatpush1.bf16.msra.mxu0 %v2372
        %2417 = vmatprep.subr.bf16.mxu0 0
        %2418 = vmatpush1.bf16.msra.mxu0 %v2371
        %2419 = vmatprep.subr.bf16.mxu0 0
        %2420 = vmatpush2.bf16.msra.mxu0 %v2386
        %2421 = vmatprep.subr.bf16.mxu0 0
        %2422 = vmatpush2.bf16.msra.mxu0 %v2385
        %2423 = vmatprep.subr.bf16.mxu0 0
        %2424 = vmatpush2.bf16.msra.mxu0 %v2384
        %2425 = vmatprep.subr.bf16.mxu0 0
        %2426 = vmatpush2.bf16.msra.mxu0 %v2383
        %2427 = vmatprep.subr.bf16.mxu0 0
        %2428 = vmatpush2.bf16.msra.mxu0 %v2382
        %2429 = vmatprep.subr.bf16.mxu0 0
        %2430 = vmatpush2.bf16.msra.mxu0 %v2381
        %2431 = vmatprep.subr.bf16.mxu0 0
        %2432 = vmatpush2.bf16.msra.mxu0 %v2380
        %2433 = vmatprep.subr.bf16.mxu0 0
        %2434 = vmatpush2.bf16.msra.mxu0 %v2379
        %2435 = vmatprep.mubr.bf16.mxu0 %v2305
        %2436 = vmatmul.mubr.bf16.gmra.mxu0 %v2304
        %v2437 = vpop.f32.mrf.mxu0
        %v2438 = vadd.f32 %v2306, %v2437
        %v2439 = vpop.f32.mrf.mxu0
        %v2440 = vpop.f32.mrf.mxu0
        %v2441 = vpop.f32.mrf.mxu0
        %2442 = vdwg.mxu0
        %v2443 = vmax.f32 %v2438, 0.0
        %v2444 = vld [vmem:[#allocation2 + $0x270] sm:$0xf]
        %v2445 = vld [vmem:[#allocation2 + $0x278] sm:$0xf]
        %v2446 = vld [vmem:[#allocation2 + $0x280] sm:$0xf]
        %v2447 = vld [vmem:[#allocation2 + $0x288] sm:$0xf]
        %v2448 = vld [vmem:[#allocation2 + $0x290] sm:$0xf]
        %v2449 = vld [vmem:[#allocation2 + $0x298] sm:$0xf]
        %v2450 = vld [vmem:[#allocation2 + $0x2a0] sm:$0xf]
        %v2451 = vld [vmem:[#allocation2 + $0x2a8] sm:$0xf]
        %v2452 = vld [vmem:[#allocation2 + $0x2b0] sm:$0xf]
        %v2453 = vld [vmem:[#allocation2 + $0x2b8] sm:$0xf]
        %v2454 = vld [vmem:[#allocation2 + $0x2c0] sm:$0xf]
        %v2455 = vld [vmem:[#allocation2 + $0x2c8] sm:$0xf]
        %v2456 = vld [vmem:[#allocation2 + $0x2d0] sm:$0xf]
        %v2457 = vld [vmem:[#allocation2 + $0x2d8] sm:$0xf]
        %v2458 = vld [vmem:[#allocation2 + $0x2e0] sm:$0xf]
        %v2459 = vld [vmem:[#allocation2 + $0x2e8] sm:$0xf]
        %v2460 = vpack.c.bf16 %v2443, %v2443
        %v2461 = vld [vmem:[#allocation5 + $0x14] ss:$0 sm:$0xff]
        %v2478 = vunpack.c.l.b16 %v2444
        %v2479 = vunpack.c.l.b16 %v2445
        %v2480 = vunpack.c.l.b16 %v2446
        %v2481 = vunpack.c.l.b16 %v2447
        %v2482 = vunpack.c.l.b16 %v2448
        %v2483 = vunpack.c.l.b16 %v2449
        %v2484 = vunpack.c.l.b16 %v2450
        %v2485 = vunpack.c.l.b16 %v2451
        %v2486 = vunpack.c.l.b16 %v2452
        %v2487 = vunpack.c.l.b16 %v2453
        %v2488 = vunpack.c.l.b16 %v2454
        %v2489 = vunpack.c.l.b16 %v2455
        %v2490 = vunpack.c.l.b16 %v2456
        %v2491 = vunpack.c.l.b16 %v2457
        %v2492 = vunpack.c.l.b16 %v2458
        %v2493 = vunpack.c.l.b16 %v2459
        %v2494 = vpack.c.b16 %v2479, %v2478
        %v2495 = vpack.c.b16 %v2481, %v2480
        %v2496 = vpack.c.b16 %v2483, %v2482
        %v2497 = vpack.c.b16 %v2485, %v2484
        %v2498 = vpack.c.b16 %v2487, %v2486
        %v2499 = vpack.c.b16 %v2489, %v2488
        %v2500 = vpack.c.b16 %v2491, %v2490
        %v2501 = vpack.c.b16 %v2493, %v2492
        %2510 = vmatprep.subr.bf16.mxu0 0
        %2511 = vmatpush1.bf16.msra.mxu0 %v2501
        %2512 = vmatprep.subr.bf16.mxu0 0
        %2513 = vmatpush1.bf16.msra.mxu0 %v2500
        %2514 = vmatprep.subr.bf16.mxu0 0
        %2515 = vmatpush1.bf16.msra.mxu0 %v2499
        %2516 = vmatprep.subr.bf16.mxu0 0
        %2517 = vmatpush1.bf16.msra.mxu0 %v2498
        %2518 = vmatprep.subr.bf16.mxu0 0
        %2519 = vmatpush1.bf16.msra.mxu0 %v2497
        %2520 = vmatprep.subr.bf16.mxu0 0
        %2521 = vmatpush1.bf16.msra.mxu0 %v2496
        %2522 = vmatprep.subr.bf16.mxu0 0
        %2523 = vmatpush1.bf16.msra.mxu0 %v2495
        %2524 = vmatprep.subr.bf16.mxu0 0
        %2525 = vmatpush1.bf16.msra.mxu0 %v2494
        %2526 = vmatprep.subr.bf16.mxu0 0
        %2527 = vmatpush2.bf16.msra.mxu0 0
        %2528 = vmatprep.subr.bf16.mxu0 0
        %2529 = vmatpush2.bf16.msra.mxu0 0
        %2530 = vmatprep.subr.bf16.mxu0 0
        %2531 = vmatpush2.bf16.msra.mxu0 0
        %2532 = vmatprep.subr.bf16.mxu0 0
        %2533 = vmatpush2.bf16.msra.mxu0 0
        %2534 = vmatprep.subr.bf16.mxu0 0
        %2535 = vmatpush2.bf16.msra.mxu0 0
        %2536 = vmatprep.subr.bf16.mxu0 0
        %2537 = vmatpush2.bf16.msra.mxu0 0
        %2538 = vmatprep.subr.bf16.mxu0 0
        %2539 = vmatpush2.bf16.msra.mxu0 0
        %2540 = vmatprep.subr.bf16.mxu0 0
        %2541 = vmatpush2.bf16.msra.mxu0 0
        %2542 = vmatprep.mubr.bf16.mxu0 0
        %2543 = vmatmul.mubr.bf16.gmra.mxu0 %v2460
        %v2544 = vpop.f32.mrf.mxu0
        %v2545 = vadd.f32 %v2461, %v2544
        %v2546 = vpop.f32.mrf.mxu0
        %v2547 = vpop.f32.mrf.mxu0
        %v2548 = vpop.f32.mrf.mxu0
        %2549 = vdwg.mxu0
        %2550 = vst [vmem:[%s275] sm:$0xff] %v2545
        %s2551 = sand.u32 %s149, 1
        %s2552 = scalar_lea.sflag [#allocation4], %s2551
        %s2553 = sand.u32 %s149, 1
        %s2554 = smul.addr %s2553, 8
        %s2555 = scalar_lea.vmem [#allocation7], %s2554
        // Predicated region
        $region49: #{tpu_custom_call.1} parent=39 // pred_check
          %p2556 = pneg %p159
        $region50: #{tpu_custom_call.1} parent=39 // pred_check_branch
          %2558 = sbr.rel (%p2556) target = $region52
        $region51: #{tpu_custom_call.1} parent=39 // pred_region
          %s2560 = ssub.s32 128, 128
          %2561 = vsyncadd %s2552, %s2560
          %s2562 = smul.addr %s21, 128
          %s2563 = scalar_lea.hbm %s5, %s2562
          %s2565 = sshll.u32 %s2555, 4
          %s2566 = int_to_ptr.vmem [resolvable:$true] %s2565
          %2568 = dma.vmem_to_hbm [thread:$0]  %s2566, 128, %s2563, %s2552
        $region52: #{tpu_custom_call.1} parent=39 // pred_fallthru
          _
      $region40: #{tpu_custom_call.1} parent=5 // pred_fallthru
        _
      %p2569 = scmp.le.s32.totalorder 2, %s16
      // Predicated region
      $region53: #{tpu_custom_call.1} parent=5 // pred_check
        %p2570 = pneg %p2569
      $region54: #{tpu_custom_call.1} parent=5 // pred_check_branch
        %2572 = sbr.rel (%p2570) target = $region56
      $region55: #{tpu_custom_call.1} parent=5 // pred_region
        %s2573 = ssub.s32 %s16, 2
        // Predicated region
        $region57: #{tpu_custom_call.1} parent=55 // pred_check
          %p2574 = pneg %p165
        $region58: #{tpu_custom_call.1} parent=55 // pred_check_branch
          %2576 = sbr.rel (%p2574) target = $region60
        $region59: #{tpu_custom_call.1} parent=55 // pred_region
          %s2577 = sand.u32 %s150, 1
          %s2578 = scalar_lea.sflag [#allocation4], %s2577
          %s2579 = sand.u32 %s150, 1
          %s2580 = smul.addr %s2579, 8
          %s2581 = scalar_lea.vmem [#allocation7], %s2580
          %2582 = dma.done %s2578, 128
        $region60: #{tpu_custom_call.1} parent=55 // pred_fallthru
          _
      $region56: #{tpu_custom_call.1} parent=5 // pred_fallthru
        _
    $region6: #{tpu_custom_call.1} parent=1 // loop_footer
      %s20 = sadd.s32 1, %s16
    $region7: #{tpu_custom_call.1} parent=1 // loop_footer_branch
      %15 = sbr.rel target = $region3
    $region8: #{tpu_custom_call.1} parent=1 // loop_exit
      _
    %2583 = vsyncpa [#allocation3], 1
    %s2584 = scalar_lea.sflag [#allocation3], 1
    %2585 = vsyncpa %s2584, 1
    %2586 = vsyncpa [#allocation6], 1
    %2587 = vsyncpa [#allocation4], 1
    %s2588 = scalar_lea.sflag [#allocation4], 1
    %2589 = vsyncpa %s2588, 1

</llo_original>
